<compile_context>
chip_gen: v5e
topology: v5e:2x2
jax: 0.10.0
libtpu: 0.0.40
codegen_flags: <defaults>
</compile_context>

<pallas_src>
import jax
import jax.numpy as jnp
from jax import lax
from jax.experimental import pallas as pl
from jax.experimental.pallas import tpu as pltpu

# ---------------- small ViT config (same topology as ViT-B-32, tiny sizes) ---
BATCH = 2
IN_CH = 3
IMG = 16
PATCH = 4
WIDTH = 32                      # transformer width D
HEADS = 4
HEAD_DIM = WIDTH // HEADS
MLP = 4 * WIDTH
LAYERS = 2
EMBED = 16                      # output embedding dim (image projection)
OUT_PAD = 128                   # lane-dense padded output width
N_PATCH = (IMG // PATCH) ** 2   # 16
SEQ = N_PATCH + 1               # 17 (CLS + patches)
S_PAD = 24                      # SEQ padded to a multiple of 8 (sublane aligned)
PATCH_DIM = IN_CH * PATCH * PATCH
EPS = 1e-5
NEG_INF = -1e30


# ---------------------------- in-kernel helpers ------------------------------
def _ln(x, g, b):
    mu = jnp.mean(x, axis=-1, keepdims=True)
    var = jnp.mean(jnp.square(x - mu), axis=-1, keepdims=True)
    return (x - mu) * lax.rsqrt(var + EPS) * g + b


def _gelu(x):
    # TODO(synk): open_clip uses exact (erf) nn.GELU; tanh approximation used here.
    c = 0.7978845608028654  # sqrt(2/pi)
    return 0.5 * x * (1.0 + jnp.tanh(c * (x + 0.044715 * x * x * x)))


# ------------------------------ fused Pallas kernel ---------------------------
def clip_encoder_kernel(
        patches_ref, patch_w_ref, base_ref, key_bias_ref, head_mask_ref,
        ln_io_ref, ln_layers_ref,
        wqkv_ref, bqkv_ref, wo_ref, bo_ref,
        w1_ref, b1_ref, w2_ref, b2_ref,
        proj_ref, out_ref):
    f32 = jnp.float32
    bf16 = jnp.bfloat16
    scale = 1.0 / (HEAD_DIM ** 0.5)

    ln_io = ln_io_ref[...]          # (4, D): [pre_g, pre_b, post_g, post_b]
    kb = key_bias_ref[...]          # (1, S_PAD): -inf on padded key columns
    hmask = head_mask_ref[...]      # (HEADS, 1, D): 0/1 per-head lane mask

    # --- patch embedding (conv1, stride=kernel, bias=False == matmul) --------
    emb = jnp.dot(patches_ref[0], patch_w_ref[...], preferred_element_type=f32)
    # CLS token + positional embedding already folded into `base` (zeros on pad rows)
    x = _ln(emb + base_ref[...], ln_io[0:1], ln_io[1:2])     # (S_PAD, D) f32

    for l in range(LAYERS):         # static unroll; weights stacked on axis 0
        lnl = ln_layers_ref[l]      # (4, D): [ln1_g, ln1_b, ln2_g, ln2_b]

        # ---------------- multi-head self-attention --------------------------
        h16 = _ln(x, lnl[0:1], lnl[1:2]).astype(bf16)
        qkv = jnp.dot(h16, wqkv_ref[l], preferred_element_type=f32) + bqkv_ref[l]
        q = qkv[:, :WIDTH]
        k = qkv[:, WIDTH:2 * WIDTH]
        v = qkv[:, 2 * WIDTH:]
        k16 = (k * scale).astype(bf16)          # fold 1/sqrt(d_h) into K (exact)
        v16 = v.astype(bf16)

        # head-stacked masked-Q: one matmul computes every head's scores exactly
        # (non-head lanes of q are zero so they contribute exactly 0).
        qs = (q[None, :, :] * hmask).reshape(HEADS * S_PAD, WIDTH).astype(bf16)
        s = lax.dot_general(qs, k16, (((1,), (1,)), ((), ())),
                            preferred_element_type=f32)        # (H*S, S)
        s = s + kb                                             # mask padded keys
        s = s - jnp.max(s, axis=-1, keepdims=True)
        p = jnp.exp(s)
        p = p * pl.reciprocal(jnp.sum(p, axis=-1, keepdims=True), approx=True)
        ctx = jnp.dot(p.astype(bf16), v16, preferred_element_type=f32)  # (H*S, D)
        # recombine heads: keep each head's own lanes and sum over the head axis
        attn = jnp.sum(ctx.reshape(HEADS, S_PAD, WIDTH) * hmask, axis=0)
        attn = jnp.dot(attn.astype(bf16), wo_ref[l],
                       preferred_element_type=f32) + bo_ref[l]
        x = x + attn

        # ---------------- MLP --------------------------------------------------
        h2 = _ln(x, lnl[2:3], lnl[3:4])
        m = _gelu(jnp.dot(h2.astype(bf16), w1_ref[l],
                          preferred_element_type=f32) + b1_ref[l])
        m = jnp.dot(m.astype(bf16), w2_ref[l],
                    preferred_element_type=f32) + b2_ref[l]
        x = x + m

    # --- pool CLS token (row 0), ln_post, image projection (lane-dense) -------
    cls = x[0:1, :]                                            # (1, D)
    hp = _ln(cls, ln_io[2:3], ln_io[3:4])
    res = jnp.dot(hp.astype(bf16), proj_ref[...],
                  preferred_element_type=f32)                  # (1, OUT_PAD)
    out_ref[0] = jnp.broadcast_to(res, (8, OUT_PAD))           # full (8,128) tile store


# --------------------------------- wrapper -------------------------------------
def patchify(x):
    # NCHW -> (B, N_patches, C*P*P), flattening order (C, ph, pw) to match
    # nn.Conv2d weight flattening semantics.
    B, C, H, W = x.shape
    p = PATCH
    x = x.reshape(B, C, H // p, p, W // p, p)
    x = x.transpose(0, 2, 4, 1, 3, 5)
    return x.reshape(B, (H // p) * (W // p), C * p * p)


@jax.jit
def clip_encode_image(x, params):
    B = x.shape[0]
    assert B == BATCH
    bf = lambda a: a.astype(jnp.bfloat16)

    # ---- wrapper-side layout plumbing only (done once, no heavy compute) ------
    patches = patchify(x)                                       # (B, N_PATCH, PATCH_DIM)
    slab = jnp.zeros((B, S_PAD, PATCH_DIM), jnp.float32)
    slab = bf(slab.at[:, 1:1 + N_PATCH, :].set(patches))        # row 0 = CLS slot, tail = pad

    base = jnp.zeros((S_PAD, WIDTH), jnp.float32)               # CLS + positional embedding
    base = base.at[0, :].set(params["cls"] + params["pos"][0])
    base = base.at[1:SEQ, :].set(params["pos"][1:])

    # additive key mask: attend only to real (non-pad) tokens of the image
    key_bias = jnp.where(jnp.arange(S_PAD)[None, :] < SEQ, 0.0, NEG_INF).astype(jnp.float32)

    # per-head lane masks (1.0 on the head's HEAD_DIM lanes)
    head_mask = (jnp.arange(WIDTH)[None, :] // HEAD_DIM
                 == jnp.arange(HEADS)[:, None]).astype(jnp.float32)
    head_mask = head_mask.reshape(HEADS, 1, WIDTH)

    # ---- pack tiny parameter tensors into a few dense arrays ------------------
    ln_io = jnp.concatenate([params["ln_pre_g"], params["ln_pre_b"],
                             params["ln_post_g"], params["ln_post_b"]], axis=0)   # (4, D)
    ln_layers = jnp.concatenate([params["ln1_g"], params["ln1_b"],
                                 params["ln2_g"], params["ln2_b"]], axis=1)       # (L, 4, D)
    wqkv = bf(jnp.concatenate([params["wq"], params["wk"], params["wv"]], axis=2))  # (L, D, 3D)
    bqkv = jnp.concatenate([params["bq"], params["bk"], params["bv"]], axis=2)      # (L, 1, 3D)
    proj_pad = jnp.zeros((WIDTH, OUT_PAD), jnp.float32).at[:, :EMBED].set(params["proj"])

    args = (
        slab, bf(params["patch_w"]), base, key_bias, head_mask,
        ln_io, ln_layers,
        wqkv, bqkv, bf(params["wo"]), params["bo"],
        bf(params["w1"]), params["b1"], bf(params["w2"]), params["b2"],
        bf(proj_pad),
    )

    const = lambda shape: pl.BlockSpec(shape, lambda b: (0,) * len(shape))
    in_specs = [
        pl.BlockSpec((1, S_PAD, PATCH_DIM), lambda b: (b, 0, 0)),   # slab (per image)
        const((PATCH_DIM, WIDTH)),                                  # patch_w
        const((S_PAD, WIDTH)),                                      # base
        const((1, S_PAD)),                                          # key_bias
        const((HEADS, 1, WIDTH)),                                   # head_mask
        const((4, WIDTH)),                                          # ln_io
        const((LAYERS, 4, WIDTH)),                                  # ln_layers
        const((LAYERS, WIDTH, 3 * WIDTH)),                          # wqkv
        const((LAYERS, 1, 3 * WIDTH)),                              # bqkv
        const((LAYERS, WIDTH, WIDTH)),                              # wo
        const((LAYERS, 1, WIDTH)),                                  # bo
        const((LAYERS, WIDTH, MLP)),                                # w1
        const((LAYERS, 1, MLP)),                                    # b1
        const((LAYERS, MLP, WIDTH)),                                # w2
        const((LAYERS, 1, WIDTH)),                                  # b2
        const((WIDTH, OUT_PAD)),                                    # proj (lane padded)
    ]
    out = pl.pallas_call(
        clip_encoder_kernel,
        out_shape=jax.ShapeDtypeStruct((B, 8, OUT_PAD), jnp.float32),
        grid=(B,),
        in_specs=in_specs,
        out_specs=pl.BlockSpec((1, 8, OUT_PAD), lambda b: (b, 0, 0)),
        compiler_params=pltpu.CompilerParams(
            dimension_semantics=("parallel",)),      # shard images across v7x's 2 TCs
    )(*args)
    return out[:, 0, :EMBED]


# ------------------------- deterministic parameter init -----------------------
def init_params(key):
    keys = iter(jax.random.split(key, 16))

    def nrm(shape, scale=0.02):
        return (scale * jax.random.normal(next(keys), shape)).astype(jnp.float32)

    ones = lambda s: jnp.ones(s, jnp.float32)
    zeros = lambda s: jnp.zeros(s, jnp.float32)
    L = LAYERS
    return {
        "patch_w": nrm((PATCH_DIM, WIDTH)),                  # conv1 (bias=False)
        "cls": nrm((WIDTH,)),
        "pos": nrm((SEQ, WIDTH)),
        "ln_pre_g": ones((1, WIDTH)), "ln_pre_b": zeros((1, WIDTH)),
        "ln_post_g": ones((1, WIDTH)), "ln_post_b": zeros((1, WIDTH)),
        "proj": nrm((WIDTH, EMBED)),
        # per-layer weights stacked on a leading LAYERS axis
        "ln1_g": ones((L, 1, WIDTH)), "ln1_b": zeros((L, 1, WIDTH)),
        "wq": nrm((L, WIDTH, WIDTH)), "bq": zeros((L, 1, WIDTH)),
        "wk": nrm((L, WIDTH, WIDTH)), "bk": zeros((L, 1, WIDTH)),
        "wv": nrm((L, WIDTH, WIDTH)), "bv": zeros((L, 1, WIDTH)),
        "wo": nrm((L, WIDTH, WIDTH)), "bo": zeros((L, 1, WIDTH)),
        "ln2_g": ones((L, 1, WIDTH)), "ln2_b": zeros((L, 1, WIDTH)),
        "w1": nrm((L, WIDTH, MLP)), "b1": zeros((L, 1, MLP)),
        "w2": nrm((L, MLP, WIDTH)), "b2": zeros((L, 1, WIDTH)),
    }


if __name__ == "__main__":
    key = jax.random.PRNGKey(0)
    pkey, xkey = jax.random.split(key)
    params = init_params(pkey)
    x = jax.random.normal(xkey, (BATCH, IN_CH, IMG, IMG), dtype=jnp.float32)  # NCHW

    out = jax.block_until_ready(clip_encode_image(x, params))
    assert out.shape == (BATCH, EMBED), out.shape
    assert bool(jnp.all(jnp.isfinite(out)))
    print("KERNEL_OK")
</pallas_src>

<mosaic_0001>
module attributes {stable_mosaic.version = 11 : i64} {
  func.func @clip_encoder_kernel(%arg0: i32, %arg1: memref<1x24x48xbf16, #tpu.memory_space<vmem>>, %arg2: memref<48x32xbf16, #tpu.memory_space<vmem>>, %arg3: memref<24x32xf32, #tpu.memory_space<vmem>>, %arg4: memref<1x24xf32, #tpu.memory_space<vmem>>, %arg5: memref<4x1x32xf32, #tpu.memory_space<vmem>>, %arg6: memref<4x32xf32, #tpu.memory_space<vmem>>, %arg7: memref<2x4x32xf32, #tpu.memory_space<vmem>>, %arg8: memref<2x32x96xbf16, #tpu.memory_space<vmem>>, %arg9: memref<2x1x96xf32, #tpu.memory_space<vmem>>, %arg10: memref<2x32x32xbf16, #tpu.memory_space<vmem>>, %arg11: memref<2x1x32xf32, #tpu.memory_space<vmem>>, %arg12: memref<2x32x128xbf16, #tpu.memory_space<vmem>>, %arg13: memref<2x1x128xf32, #tpu.memory_space<vmem>>, %arg14: memref<2x128x32xbf16, #tpu.memory_space<vmem>>, %arg15: memref<2x1x32xf32, #tpu.memory_space<vmem>>, %arg16: memref<32x128xbf16, #tpu.memory_space<vmem>>, %arg17: memref<1x8x128xf32, #tpu.memory_space<vmem>>) attributes {dimension_semantics = [#tpu.dimension_semantics<parallel>], iteration_bounds = array<i64: 2>, scalar_prefetch = 0 : i64, scratch_operands = 0 : i64, tpu.core_type = #tpu.core_type<tc>, window_params = [{transform_indices = @transform_0, window_bounds = array<i64: 1, 24, 48>}, {pipeline_mode = #tpu.pipeline_mode<synchronous>, transform_indices = @transform_1, window_bounds = array<i64: 48, 32>}, {pipeline_mode = #tpu.pipeline_mode<synchronous>, transform_indices = @transform_2, window_bounds = array<i64: 24, 32>}, {pipeline_mode = #tpu.pipeline_mode<synchronous>, transform_indices = @transform_3, window_bounds = array<i64: 1, 24>}, {pipeline_mode = #tpu.pipeline_mode<synchronous>, transform_indices = @transform_4, window_bounds = array<i64: 4, 1, 32>}, {pipeline_mode = #tpu.pipeline_mode<synchronous>, transform_indices = @transform_5, window_bounds = array<i64: 4, 32>}, {pipeline_mode = #tpu.pipeline_mode<synchronous>, transform_indices = @transform_6, window_bounds = array<i64: 2, 4, 32>}, {pipeline_mode = #tpu.pipeline_mode<synchronous>, transform_indices = @transform_7, window_bounds = array<i64: 2, 32, 96>}, {pipeline_mode = #tpu.pipeline_mode<synchronous>, transform_indices = @transform_8, window_bounds = array<i64: 2, 1, 96>}, {pipeline_mode = #tpu.pipeline_mode<synchronous>, transform_indices = @transform_9, window_bounds = array<i64: 2, 32, 32>}, {pipeline_mode = #tpu.pipeline_mode<synchronous>, transform_indices = @transform_10, window_bounds = array<i64: 2, 1, 32>}, {pipeline_mode = #tpu.pipeline_mode<synchronous>, transform_indices = @transform_11, window_bounds = array<i64: 2, 32, 128>}, {pipeline_mode = #tpu.pipeline_mode<synchronous>, transform_indices = @transform_12, window_bounds = array<i64: 2, 1, 128>}, {pipeline_mode = #tpu.pipeline_mode<synchronous>, transform_indices = @transform_13, window_bounds = array<i64: 2, 128, 32>}, {pipeline_mode = #tpu.pipeline_mode<synchronous>, transform_indices = @transform_14, window_bounds = array<i64: 2, 1, 32>}, {pipeline_mode = #tpu.pipeline_mode<synchronous>, transform_indices = @transform_15, window_bounds = array<i64: 32, 128>}, {transform_indices = @transform_16, window_bounds = array<i64: 1, 8, 128>}]} {
    %c0 = arith.constant 0 : index
    %c0_0 = arith.constant 0 : index
    %0 = vector.load %arg6[%c0, %c0_0] : memref<4x32xf32, #tpu.memory_space<vmem>>, vector<4x32xf32>
    %c0_1 = arith.constant 0 : index
    %c0_2 = arith.constant 0 : index
    %1 = vector.load %arg4[%c0_1, %c0_2] : memref<1x24xf32, #tpu.memory_space<vmem>>, vector<1x24xf32>
    %c0_3 = arith.constant 0 : index
    %c0_4 = arith.constant 0 : index
    %c0_5 = arith.constant 0 : index
    %2 = vector.load %arg5[%c0_3, %c0_4, %c0_5] : memref<4x1x32xf32, #tpu.memory_space<vmem>>, vector<4x1x32xf32>
    %c0_6 = arith.constant 0 : index
    %c0_7 = arith.constant 0 : index
    %c0_8 = arith.constant 0 : index
    %3 = vector.load %arg1[%c0_6, %c0_7, %c0_8] : memref<1x24x48xbf16, #tpu.memory_space<vmem>>, vector<1x24x48xbf16>
    %4 = vector.shape_cast %3 : vector<1x24x48xbf16> to vector<24x48xbf16>
    %c0_9 = arith.constant 0 : index
    %c0_10 = arith.constant 0 : index
    %5 = vector.load %arg2[%c0_9, %c0_10] : memref<48x32xbf16, #tpu.memory_space<vmem>>, vector<48x32xbf16>
    %cst = arith.constant dense<0.000000e+00> : vector<24x32xf32>
    %6 = tpu.matmul %4, %5, %cst {dimension_numbers = #tpu.dot_dimension_numbers<[1], [0], [0], [1], [0, 0, 1, 1], [], []>} : vector<24x48xbf16>, vector<48x32xbf16>, vector<24x32xf32> -> vector<24x32xf32>
    %c0_11 = arith.constant 0 : index
    %c0_12 = arith.constant 0 : index
    %7 = vector.load %arg3[%c0_11, %c0_12] : memref<24x32xf32, #tpu.memory_space<vmem>>, vector<24x32xf32>
    %8 = arith.addf %6, %7 : vector<24x32xf32>
    %9 = vector.extract_strided_slice %0 {offsets = [0, 0], sizes = [1, 32], strides = [1, 1]} : vector<4x32xf32> to vector<1x32xf32>
    %10 = vector.extract_strided_slice %0 {offsets = [1, 0], sizes = [1, 32], strides = [1, 1]} : vector<4x32xf32> to vector<1x32xf32>
    %cst_13 = arith.constant dense<0.000000e+00> : vector<24xf32>
    %11 = vector.multi_reduction <add>, %8, %cst_13 [1] : vector<24x32xf32> to vector<24xf32>
    %12 = vector.shape_cast %11 : vector<24xf32> to vector<24x1xf32>
    %cst_14 = arith.constant 3.200000e+01 : f32
    %13 = vector.broadcast %cst_14 : f32 to vector<24x1xf32>
    %14 = arith.divf %12, %13 : vector<24x1xf32>
    %15 = vector.broadcast %14 : vector<24x1xf32> to vector<24x32xf32>
    %16 = arith.subf %8, %15 : vector<24x32xf32>
    %17 = arith.mulf %16, %16 : vector<24x32xf32>
    %cst_15 = arith.constant dense<0.000000e+00> : vector<24xf32>
    %18 = vector.multi_reduction <add>, %17, %cst_15 [1] : vector<24x32xf32> to vector<24xf32>
    %19 = vector.shape_cast %18 : vector<24xf32> to vector<24x1xf32>
    %cst_16 = arith.constant 3.200000e+01 : f32
    %20 = vector.broadcast %cst_16 : f32 to vector<24x1xf32>
    %21 = arith.divf %19, %20 : vector<24x1xf32>
    %22 = vector.broadcast %14 : vector<24x1xf32> to vector<24x32xf32>
    %23 = arith.subf %8, %22 : vector<24x32xf32>
    %cst_17 = arith.constant 9.99999974E-6 : f32
    %24 = vector.broadcast %cst_17 : f32 to vector<24x1xf32>
    %25 = arith.addf %21, %24 : vector<24x1xf32>
    %26 = math.rsqrt %25 : vector<24x1xf32>
    %27 = vector.broadcast %26 : vector<24x1xf32> to vector<24x32xf32>
    %28 = arith.mulf %23, %27 : vector<24x32xf32>
    %29 = vector.broadcast %9 : vector<1x32xf32> to vector<24x32xf32>
    %30 = arith.mulf %28, %29 : vector<24x32xf32>
    %31 = vector.broadcast %10 : vector<1x32xf32> to vector<24x32xf32>
    %32 = arith.addf %30, %31 : vector<24x32xf32>
    %c0_18 = arith.constant 0 : index
    %c0_19 = arith.constant 0 : index
    %c0_20 = arith.constant 0 : index
    %33 = vector.load %arg7[%c0_18, %c0_19, %c0_20] : memref<2x4x32xf32, #tpu.memory_space<vmem>>, vector<1x4x32xf32>
    %34 = vector.shape_cast %33 : vector<1x4x32xf32> to vector<4x32xf32>
    %35 = vector.extract_strided_slice %34 {offsets = [0, 0], sizes = [1, 32], strides = [1, 1]} : vector<4x32xf32> to vector<1x32xf32>
    %36 = vector.extract_strided_slice %34 {offsets = [1, 0], sizes = [1, 32], strides = [1, 1]} : vector<4x32xf32> to vector<1x32xf32>
    %cst_21 = arith.constant dense<0.000000e+00> : vector<24xf32>
    %37 = vector.multi_reduction <add>, %32, %cst_21 [1] : vector<24x32xf32> to vector<24xf32>
    %38 = vector.shape_cast %37 : vector<24xf32> to vector<24x1xf32>
    %cst_22 = arith.constant 3.200000e+01 : f32
    %39 = vector.broadcast %cst_22 : f32 to vector<24x1xf32>
    %40 = arith.divf %38, %39 : vector<24x1xf32>
    %41 = vector.broadcast %40 : vector<24x1xf32> to vector<24x32xf32>
    %42 = arith.subf %32, %41 : vector<24x32xf32>
    %43 = arith.mulf %42, %42 : vector<24x32xf32>
    %cst_23 = arith.constant dense<0.000000e+00> : vector<24xf32>
    %44 = vector.multi_reduction <add>, %43, %cst_23 [1] : vector<24x32xf32> to vector<24xf32>
    %45 = vector.shape_cast %44 : vector<24xf32> to vector<24x1xf32>
    %cst_24 = arith.constant 3.200000e+01 : f32
    %46 = vector.broadcast %cst_24 : f32 to vector<24x1xf32>
    %47 = arith.divf %45, %46 : vector<24x1xf32>
    %48 = vector.broadcast %40 : vector<24x1xf32> to vector<24x32xf32>
    %49 = arith.subf %32, %48 : vector<24x32xf32>
    %cst_25 = arith.constant 9.99999974E-6 : f32
    %50 = vector.broadcast %cst_25 : f32 to vector<24x1xf32>
    %51 = arith.addf %47, %50 : vector<24x1xf32>
    %52 = math.rsqrt %51 : vector<24x1xf32>
    %53 = vector.broadcast %52 : vector<24x1xf32> to vector<24x32xf32>
    %54 = arith.mulf %49, %53 : vector<24x32xf32>
    %55 = vector.broadcast %35 : vector<1x32xf32> to vector<24x32xf32>
    %56 = arith.mulf %54, %55 : vector<24x32xf32>
    %57 = vector.broadcast %36 : vector<1x32xf32> to vector<24x32xf32>
    %58 = arith.addf %56, %57 : vector<24x32xf32>
    %59 = arith.truncf %58 : vector<24x32xf32> to vector<24x32xbf16>
    %c0_26 = arith.constant 0 : index
    %c0_27 = arith.constant 0 : index
    %c0_28 = arith.constant 0 : index
    %60 = vector.load %arg8[%c0_26, %c0_27, %c0_28] : memref<2x32x96xbf16, #tpu.memory_space<vmem>>, vector<1x32x96xbf16>
    %61 = vector.shape_cast %60 : vector<1x32x96xbf16> to vector<32x96xbf16>
    %cst_29 = arith.constant dense<0.000000e+00> : vector<24x96xf32>
    %62 = tpu.matmul %59, %61, %cst_29 {dimension_numbers = #tpu.dot_dimension_numbers<[1], [0], [0], [1], [0, 0, 1, 1], [], []>} : vector<24x32xbf16>, vector<32x96xbf16>, vector<24x96xf32> -> vector<24x96xf32>
    %c0_30 = arith.constant 0 : index
    %c0_31 = arith.constant 0 : index
    %c0_32 = arith.constant 0 : index
    %63 = vector.load %arg9[%c0_30, %c0_31, %c0_32] : memref<2x1x96xf32, #tpu.memory_space<vmem>>, vector<1x1x96xf32>
    %64 = vector.shape_cast %63 : vector<1x1x96xf32> to vector<1x96xf32>
    %65 = vector.broadcast %64 : vector<1x96xf32> to vector<24x96xf32>
    %66 = arith.addf %62, %65 : vector<24x96xf32>
    %67 = vector.extract_strided_slice %66 {offsets = [0, 0], sizes = [24, 32], strides = [1, 1]} : vector<24x96xf32> to vector<24x32xf32>
    %68 = vector.extract_strided_slice %66 {offsets = [0, 32], sizes = [24, 32], strides = [1, 1]} : vector<24x96xf32> to vector<24x32xf32>
    %69 = vector.extract_strided_slice %66 {offsets = [0, 64], sizes = [24, 32], strides = [1, 1]} : vector<24x96xf32> to vector<24x32xf32>
    %cst_33 = arith.constant 0.353553385 : f32
    %70 = vector.broadcast %cst_33 : f32 to vector<24x32xf32>
    %71 = arith.mulf %68, %70 : vector<24x32xf32>
    %72 = arith.truncf %71 : vector<24x32xf32> to vector<24x32xbf16>
    %73 = arith.truncf %69 : vector<24x32xf32> to vector<24x32xbf16>
    %74 = vector.shape_cast %67 : vector<24x32xf32> to vector<1x24x32xf32>
    %75 = vector.broadcast %74 : vector<1x24x32xf32> to vector<4x24x32xf32>
    %76 = vector.broadcast %2 : vector<4x1x32xf32> to vector<4x24x32xf32>
    %77 = arith.mulf %75, %76 : vector<4x24x32xf32>
    %78 = vector.shape_cast %77 : vector<4x24x32xf32> to vector<96x32xf32>
    %79 = arith.truncf %78 : vector<96x32xf32> to vector<96x32xbf16>
    %cst_34 = arith.constant dense<0.000000e+00> : vector<96x24xf32>
    %80 = tpu.matmul %79, %72, %cst_34 {dimension_numbers = #tpu.dot_dimension_numbers<[1], [1], [0], [0], [0, 0, 1, 0], [], []>} : vector<96x32xbf16>, vector<24x32xbf16>, vector<96x24xf32> -> vector<96x24xf32>
    %81 = vector.broadcast %1 : vector<1x24xf32> to vector<96x24xf32>
    %82 = arith.addf %80, %81 : vector<96x24xf32>
    %cst_35 = arith.constant dense<0xFF800000> : vector<96xf32>
    %83 = vector.multi_reduction <maximumf>, %82, %cst_35 [1] : vector<96x24xf32> to vector<96xf32>
    %84 = vector.shape_cast %83 : vector<96xf32> to vector<96x1xf32>
    %85 = vector.broadcast %84 : vector<96x1xf32> to vector<96x24xf32>
    %86 = arith.subf %82, %85 : vector<96x24xf32>
    %87 = math.exp %86 : vector<96x24xf32>
    %cst_36 = arith.constant dense<0.000000e+00> : vector<96xf32>
    %88 = vector.multi_reduction <add>, %87, %cst_36 [1] : vector<96x24xf32> to vector<96xf32>
    %89 = vector.shape_cast %88 : vector<96xf32> to vector<96x1xf32>
    %90 = tpu.reciprocal %89 {approx = true} : vector<96x1xf32> -> vector<96x1xf32>
    %91 = vector.broadcast %90 : vector<96x1xf32> to vector<96x24xf32>
    %92 = arith.mulf %87, %91 : vector<96x24xf32>
    %93 = arith.truncf %92 : vector<96x24xf32> to vector<96x24xbf16>
    %cst_37 = arith.constant dense<0.000000e+00> : vector<96x32xf32>
    %94 = tpu.matmul %93, %73, %cst_37 {dimension_numbers = #tpu.dot_dimension_numbers<[1], [0], [0], [1], [0, 0, 1, 1], [], []>} : vector<96x24xbf16>, vector<24x32xbf16>, vector<96x32xf32> -> vector<96x32xf32>
    %95 = vector.shape_cast %94 : vector<96x32xf32> to vector<4x24x32xf32>
    %96 = vector.broadcast %2 : vector<4x1x32xf32> to vector<4x24x32xf32>
    %97 = arith.mulf %95, %96 : vector<4x24x32xf32>
    %cst_38 = arith.constant dense<0.000000e+00> : vector<24x32xf32>
    %98 = vector.multi_reduction <add>, %97, %cst_38 [0] : vector<4x24x32xf32> to vector<24x32xf32>
    %99 = arith.truncf %98 : vector<24x32xf32> to vector<24x32xbf16>
    %c0_39 = arith.constant 0 : index
    %c0_40 = arith.constant 0 : index
    %c0_41 = arith.constant 0 : index
    %100 = vector.load %arg10[%c0_39, %c0_40, %c0_41] : memref<2x32x32xbf16, #tpu.memory_space<vmem>>, vector<1x32x32xbf16>
    %101 = vector.shape_cast %100 : vector<1x32x32xbf16> to vector<32x32xbf16>
    %cst_42 = arith.constant dense<0.000000e+00> : vector<24x32xf32>
    %102 = tpu.matmul %99, %101, %cst_42 {dimension_numbers = #tpu.dot_dimension_numbers<[1], [0], [0], [1], [0, 0, 1, 1], [], []>} : vector<24x32xbf16>, vector<32x32xbf16>, vector<24x32xf32> -> vector<24x32xf32>
    %c0_43 = arith.constant 0 : index
    %c0_44 = arith.constant 0 : index
    %c0_45 = arith.constant 0 : index
    %103 = vector.load %arg11[%c0_43, %c0_44, %c0_45] : memref<2x1x32xf32, #tpu.memory_space<vmem>>, vector<1x1x32xf32>
    %104 = vector.shape_cast %103 : vector<1x1x32xf32> to vector<1x32xf32>
    %105 = vector.broadcast %104 : vector<1x32xf32> to vector<24x32xf32>
    %106 = arith.addf %102, %105 : vector<24x32xf32>
    %107 = arith.addf %32, %106 : vector<24x32xf32>
    %108 = vector.extract_strided_slice %34 {offsets = [2, 0], sizes = [1, 32], strides = [1, 1]} : vector<4x32xf32> to vector<1x32xf32>
    %109 = vector.extract_strided_slice %34 {offsets = [3, 0], sizes = [1, 32], strides = [1, 1]} : vector<4x32xf32> to vector<1x32xf32>
    %cst_46 = arith.constant dense<0.000000e+00> : vector<24xf32>
    %110 = vector.multi_reduction <add>, %107, %cst_46 [1] : vector<24x32xf32> to vector<24xf32>
    %111 = vector.shape_cast %110 : vector<24xf32> to vector<24x1xf32>
    %cst_47 = arith.constant 3.200000e+01 : f32
    %112 = vector.broadcast %cst_47 : f32 to vector<24x1xf32>
    %113 = arith.divf %111, %112 : vector<24x1xf32>
    %114 = vector.broadcast %113 : vector<24x1xf32> to vector<24x32xf32>
    %115 = arith.subf %107, %114 : vector<24x32xf32>
    %116 = arith.mulf %115, %115 : vector<24x32xf32>
    %cst_48 = arith.constant dense<0.000000e+00> : vector<24xf32>
    %117 = vector.multi_reduction <add>, %116, %cst_48 [1] : vector<24x32xf32> to vector<24xf32>
    %118 = vector.shape_cast %117 : vector<24xf32> to vector<24x1xf32>
    %cst_49 = arith.constant 3.200000e+01 : f32
    %119 = vector.broadcast %cst_49 : f32 to vector<24x1xf32>
    %120 = arith.divf %118, %119 : vector<24x1xf32>
    %121 = vector.broadcast %113 : vector<24x1xf32> to vector<24x32xf32>
    %122 = arith.subf %107, %121 : vector<24x32xf32>
    %cst_50 = arith.constant 9.99999974E-6 : f32
    %123 = vector.broadcast %cst_50 : f32 to vector<24x1xf32>
    %124 = arith.addf %120, %123 : vector<24x1xf32>
    %125 = math.rsqrt %124 : vector<24x1xf32>
    %126 = vector.broadcast %125 : vector<24x1xf32> to vector<24x32xf32>
    %127 = arith.mulf %122, %126 : vector<24x32xf32>
    %128 = vector.broadcast %108 : vector<1x32xf32> to vector<24x32xf32>
    %129 = arith.mulf %127, %128 : vector<24x32xf32>
    %130 = vector.broadcast %109 : vector<1x32xf32> to vector<24x32xf32>
    %131 = arith.addf %129, %130 : vector<24x32xf32>
    %132 = arith.truncf %131 : vector<24x32xf32> to vector<24x32xbf16>
    %c0_51 = arith.constant 0 : index
    %c0_52 = arith.constant 0 : index
    %c0_53 = arith.constant 0 : index
    %133 = vector.load %arg12[%c0_51, %c0_52, %c0_53] : memref<2x32x128xbf16, #tpu.memory_space<vmem>>, vector<1x32x128xbf16>
    %134 = vector.shape_cast %133 : vector<1x32x128xbf16> to vector<32x128xbf16>
    %cst_54 = arith.constant dense<0.000000e+00> : vector<24x128xf32>
    %135 = tpu.matmul %132, %134, %cst_54 {dimension_numbers = #tpu.dot_dimension_numbers<[1], [0], [0], [1], [0, 0, 1, 1], [], []>} : vector<24x32xbf16>, vector<32x128xbf16>, vector<24x128xf32> -> vector<24x128xf32>
    %c0_55 = arith.constant 0 : index
    %c0_56 = arith.constant 0 : index
    %c0_57 = arith.constant 0 : index
    %136 = vector.load %arg13[%c0_55, %c0_56, %c0_57] : memref<2x1x128xf32, #tpu.memory_space<vmem>>, vector<1x1x128xf32>
    %137 = vector.shape_cast %136 : vector<1x1x128xf32> to vector<1x128xf32>
    %138 = vector.broadcast %137 : vector<1x128xf32> to vector<24x128xf32>
    %139 = arith.addf %135, %138 : vector<24x128xf32>
    %cst_58 = arith.constant 5.000000e-01 : f32
    %140 = vector.broadcast %cst_58 : f32 to vector<24x128xf32>
    %141 = arith.mulf %140, %139 : vector<24x128xf32>
    %cst_59 = arith.constant 4.471500e-02 : f32
    %142 = vector.broadcast %cst_59 : f32 to vector<24x128xf32>
    %143 = arith.mulf %142, %139 : vector<24x128xf32>
    %144 = arith.mulf %143, %139 : vector<24x128xf32>
    %145 = arith.mulf %144, %139 : vector<24x128xf32>
    %146 = arith.addf %139, %145 : vector<24x128xf32>
    %cst_60 = arith.constant 0.797884583 : f32
    %147 = vector.broadcast %cst_60 : f32 to vector<24x128xf32>
    %148 = arith.mulf %147, %146 : vector<24x128xf32>
    %149 = math.tanh %148 : vector<24x128xf32>
    %cst_61 = arith.constant 1.000000e+00 : f32
    %150 = vector.broadcast %cst_61 : f32 to vector<24x128xf32>
    %151 = arith.addf %150, %149 : vector<24x128xf32>
    %152 = arith.mulf %141, %151 : vector<24x128xf32>
    %153 = arith.truncf %152 : vector<24x128xf32> to vector<24x128xbf16>
    %c0_62 = arith.constant 0 : index
    %c0_63 = arith.constant 0 : index
    %c0_64 = arith.constant 0 : index
    %154 = vector.load %arg14[%c0_62, %c0_63, %c0_64] : memref<2x128x32xbf16, #tpu.memory_space<vmem>>, vector<1x128x32xbf16>
    %155 = vector.shape_cast %154 : vector<1x128x32xbf16> to vector<128x32xbf16>
    %cst_65 = arith.constant dense<0.000000e+00> : vector<24x32xf32>
    %156 = tpu.matmul %153, %155, %cst_65 {dimension_numbers = #tpu.dot_dimension_numbers<[1], [0], [0], [1], [0, 0, 1, 1], [], []>} : vector<24x128xbf16>, vector<128x32xbf16>, vector<24x32xf32> -> vector<24x32xf32>
    %c0_66 = arith.constant 0 : index
    %c0_67 = arith.constant 0 : index
    %c0_68 = arith.constant 0 : index
    %157 = vector.load %arg15[%c0_66, %c0_67, %c0_68] : memref<2x1x32xf32, #tpu.memory_space<vmem>>, vector<1x1x32xf32>
    %158 = vector.shape_cast %157 : vector<1x1x32xf32> to vector<1x32xf32>
    %159 = vector.broadcast %158 : vector<1x32xf32> to vector<24x32xf32>
    %160 = arith.addf %156, %159 : vector<24x32xf32>
    %161 = arith.addf %107, %160 : vector<24x32xf32>
    %c1 = arith.constant 1 : index
    %c0_69 = arith.constant 0 : index
    %c0_70 = arith.constant 0 : index
    %162 = vector.load %arg7[%c1, %c0_69, %c0_70] : memref<2x4x32xf32, #tpu.memory_space<vmem>>, vector<1x4x32xf32>
    %163 = vector.shape_cast %162 : vector<1x4x32xf32> to vector<4x32xf32>
    %164 = vector.extract_strided_slice %163 {offsets = [0, 0], sizes = [1, 32], strides = [1, 1]} : vector<4x32xf32> to vector<1x32xf32>
    %165 = vector.extract_strided_slice %163 {offsets = [1, 0], sizes = [1, 32], strides = [1, 1]} : vector<4x32xf32> to vector<1x32xf32>
    %cst_71 = arith.constant dense<0.000000e+00> : vector<24xf32>
    %166 = vector.multi_reduction <add>, %161, %cst_71 [1] : vector<24x32xf32> to vector<24xf32>
    %167 = vector.shape_cast %166 : vector<24xf32> to vector<24x1xf32>
    %cst_72 = arith.constant 3.200000e+01 : f32
    %168 = vector.broadcast %cst_72 : f32 to vector<24x1xf32>
    %169 = arith.divf %167, %168 : vector<24x1xf32>
    %170 = vector.broadcast %169 : vector<24x1xf32> to vector<24x32xf32>
    %171 = arith.subf %161, %170 : vector<24x32xf32>
    %172 = arith.mulf %171, %171 : vector<24x32xf32>
    %cst_73 = arith.constant dense<0.000000e+00> : vector<24xf32>
    %173 = vector.multi_reduction <add>, %172, %cst_73 [1] : vector<24x32xf32> to vector<24xf32>
    %174 = vector.shape_cast %173 : vector<24xf32> to vector<24x1xf32>
    %cst_74 = arith.constant 3.200000e+01 : f32
    %175 = vector.broadcast %cst_74 : f32 to vector<24x1xf32>
    %176 = arith.divf %174, %175 : vector<24x1xf32>
    %177 = vector.broadcast %169 : vector<24x1xf32> to vector<24x32xf32>
    %178 = arith.subf %161, %177 : vector<24x32xf32>
    %cst_75 = arith.constant 9.99999974E-6 : f32
    %179 = vector.broadcast %cst_75 : f32 to vector<24x1xf32>
    %180 = arith.addf %176, %179 : vector<24x1xf32>
    %181 = math.rsqrt %180 : vector<24x1xf32>
    %182 = vector.broadcast %181 : vector<24x1xf32> to vector<24x32xf32>
    %183 = arith.mulf %178, %182 : vector<24x32xf32>
    %184 = vector.broadcast %164 : vector<1x32xf32> to vector<24x32xf32>
    %185 = arith.mulf %183, %184 : vector<24x32xf32>
    %186 = vector.broadcast %165 : vector<1x32xf32> to vector<24x32xf32>
    %187 = arith.addf %185, %186 : vector<24x32xf32>
    %188 = arith.truncf %187 : vector<24x32xf32> to vector<24x32xbf16>
    %c1_76 = arith.constant 1 : index
    %c0_77 = arith.constant 0 : index
    %c0_78 = arith.constant 0 : index
    %189 = vector.load %arg8[%c1_76, %c0_77, %c0_78] : memref<2x32x96xbf16, #tpu.memory_space<vmem>>, vector<1x32x96xbf16>
    %190 = vector.shape_cast %189 : vector<1x32x96xbf16> to vector<32x96xbf16>
    %cst_79 = arith.constant dense<0.000000e+00> : vector<24x96xf32>
    %191 = tpu.matmul %188, %190, %cst_79 {dimension_numbers = #tpu.dot_dimension_numbers<[1], [0], [0], [1], [0, 0, 1, 1], [], []>} : vector<24x32xbf16>, vector<32x96xbf16>, vector<24x96xf32> -> vector<24x96xf32>
    %c1_80 = arith.constant 1 : index
    %c0_81 = arith.constant 0 : index
    %c0_82 = arith.constant 0 : index
    %192 = vector.load %arg9[%c1_80, %c0_81, %c0_82] : memref<2x1x96xf32, #tpu.memory_space<vmem>>, vector<1x1x96xf32>
    %193 = vector.shape_cast %192 : vector<1x1x96xf32> to vector<1x96xf32>
    %194 = vector.broadcast %193 : vector<1x96xf32> to vector<24x96xf32>
    %195 = arith.addf %191, %194 : vector<24x96xf32>
    %196 = vector.extract_strided_slice %195 {offsets = [0, 0], sizes = [24, 32], strides = [1, 1]} : vector<24x96xf32> to vector<24x32xf32>
    %197 = vector.extract_strided_slice %195 {offsets = [0, 32], sizes = [24, 32], strides = [1, 1]} : vector<24x96xf32> to vector<24x32xf32>
    %198 = vector.extract_strided_slice %195 {offsets = [0, 64], sizes = [24, 32], strides = [1, 1]} : vector<24x96xf32> to vector<24x32xf32>
    %cst_83 = arith.constant 0.353553385 : f32
    %199 = vector.broadcast %cst_83 : f32 to vector<24x32xf32>
    %200 = arith.mulf %197, %199 : vector<24x32xf32>
    %201 = arith.truncf %200 : vector<24x32xf32> to vector<24x32xbf16>
    %202 = arith.truncf %198 : vector<24x32xf32> to vector<24x32xbf16>
    %203 = vector.shape_cast %196 : vector<24x32xf32> to vector<1x24x32xf32>
    %204 = vector.broadcast %203 : vector<1x24x32xf32> to vector<4x24x32xf32>
    %205 = vector.broadcast %2 : vector<4x1x32xf32> to vector<4x24x32xf32>
    %206 = arith.mulf %204, %205 : vector<4x24x32xf32>
    %207 = vector.shape_cast %206 : vector<4x24x32xf32> to vector<96x32xf32>
    %208 = arith.truncf %207 : vector<96x32xf32> to vector<96x32xbf16>
    %cst_84 = arith.constant dense<0.000000e+00> : vector<96x24xf32>
    %209 = tpu.matmul %208, %201, %cst_84 {dimension_numbers = #tpu.dot_dimension_numbers<[1], [1], [0], [0], [0, 0, 1, 0], [], []>} : vector<96x32xbf16>, vector<24x32xbf16>, vector<96x24xf32> -> vector<96x24xf32>
    %210 = vector.broadcast %1 : vector<1x24xf32> to vector<96x24xf32>
    %211 = arith.addf %209, %210 : vector<96x24xf32>
    %cst_85 = arith.constant dense<0xFF800000> : vector<96xf32>
    %212 = vector.multi_reduction <maximumf>, %211, %cst_85 [1] : vector<96x24xf32> to vector<96xf32>
    %213 = vector.shape_cast %212 : vector<96xf32> to vector<96x1xf32>
    %214 = vector.broadcast %213 : vector<96x1xf32> to vector<96x24xf32>
    %215 = arith.subf %211, %214 : vector<96x24xf32>
    %216 = math.exp %215 : vector<96x24xf32>
    %cst_86 = arith.constant dense<0.000000e+00> : vector<96xf32>
    %217 = vector.multi_reduction <add>, %216, %cst_86 [1] : vector<96x24xf32> to vector<96xf32>
    %218 = vector.shape_cast %217 : vector<96xf32> to vector<96x1xf32>
    %219 = tpu.reciprocal %218 {approx = true} : vector<96x1xf32> -> vector<96x1xf32>
    %220 = vector.broadcast %219 : vector<96x1xf32> to vector<96x24xf32>
    %221 = arith.mulf %216, %220 : vector<96x24xf32>
    %222 = arith.truncf %221 : vector<96x24xf32> to vector<96x24xbf16>
    %cst_87 = arith.constant dense<0.000000e+00> : vector<96x32xf32>
    %223 = tpu.matmul %222, %202, %cst_87 {dimension_numbers = #tpu.dot_dimension_numbers<[1], [0], [0], [1], [0, 0, 1, 1], [], []>} : vector<96x24xbf16>, vector<24x32xbf16>, vector<96x32xf32> -> vector<96x32xf32>
    %224 = vector.shape_cast %223 : vector<96x32xf32> to vector<4x24x32xf32>
    %225 = vector.broadcast %2 : vector<4x1x32xf32> to vector<4x24x32xf32>
    %226 = arith.mulf %224, %225 : vector<4x24x32xf32>
    %cst_88 = arith.constant dense<0.000000e+00> : vector<24x32xf32>
    %227 = vector.multi_reduction <add>, %226, %cst_88 [0] : vector<4x24x32xf32> to vector<24x32xf32>
    %228 = arith.truncf %227 : vector<24x32xf32> to vector<24x32xbf16>
    %c1_89 = arith.constant 1 : index
    %c0_90 = arith.constant 0 : index
    %c0_91 = arith.constant 0 : index
    %229 = vector.load %arg10[%c1_89, %c0_90, %c0_91] : memref<2x32x32xbf16, #tpu.memory_space<vmem>>, vector<1x32x32xbf16>
    %230 = vector.shape_cast %229 : vector<1x32x32xbf16> to vector<32x32xbf16>
    %cst_92 = arith.constant dense<0.000000e+00> : vector<24x32xf32>
    %231 = tpu.matmul %228, %230, %cst_92 {dimension_numbers = #tpu.dot_dimension_numbers<[1], [0], [0], [1], [0, 0, 1, 1], [], []>} : vector<24x32xbf16>, vector<32x32xbf16>, vector<24x32xf32> -> vector<24x32xf32>
    %c1_93 = arith.constant 1 : index
    %c0_94 = arith.constant 0 : index
    %c0_95 = arith.constant 0 : index
    %232 = vector.load %arg11[%c1_93, %c0_94, %c0_95] : memref<2x1x32xf32, #tpu.memory_space<vmem>>, vector<1x1x32xf32>
    %233 = vector.shape_cast %232 : vector<1x1x32xf32> to vector<1x32xf32>
    %234 = vector.broadcast %233 : vector<1x32xf32> to vector<24x32xf32>
    %235 = arith.addf %231, %234 : vector<24x32xf32>
    %236 = arith.addf %161, %235 : vector<24x32xf32>
    %237 = vector.extract_strided_slice %163 {offsets = [2, 0], sizes = [1, 32], strides = [1, 1]} : vector<4x32xf32> to vector<1x32xf32>
    %238 = vector.extract_strided_slice %163 {offsets = [3, 0], sizes = [1, 32], strides = [1, 1]} : vector<4x32xf32> to vector<1x32xf32>
    %cst_96 = arith.constant dense<0.000000e+00> : vector<24xf32>
    %239 = vector.multi_reduction <add>, %236, %cst_96 [1] : vector<24x32xf32> to vector<24xf32>
    %240 = vector.shape_cast %239 : vector<24xf32> to vector<24x1xf32>
    %cst_97 = arith.constant 3.200000e+01 : f32
    %241 = vector.broadcast %cst_97 : f32 to vector<24x1xf32>
    %242 = arith.divf %240, %241 : vector<24x1xf32>
    %243 = vector.broadcast %242 : vector<24x1xf32> to vector<24x32xf32>
    %244 = arith.subf %236, %243 : vector<24x32xf32>
    %245 = arith.mulf %244, %244 : vector<24x32xf32>
    %cst_98 = arith.constant dense<0.000000e+00> : vector<24xf32>
    %246 = vector.multi_reduction <add>, %245, %cst_98 [1] : vector<24x32xf32> to vector<24xf32>
    %247 = vector.shape_cast %246 : vector<24xf32> to vector<24x1xf32>
    %cst_99 = arith.constant 3.200000e+01 : f32
    %248 = vector.broadcast %cst_99 : f32 to vector<24x1xf32>
    %249 = arith.divf %247, %248 : vector<24x1xf32>
    %250 = vector.broadcast %242 : vector<24x1xf32> to vector<24x32xf32>
    %251 = arith.subf %236, %250 : vector<24x32xf32>
    %cst_100 = arith.constant 9.99999974E-6 : f32
    %252 = vector.broadcast %cst_100 : f32 to vector<24x1xf32>
    %253 = arith.addf %249, %252 : vector<24x1xf32>
    %254 = math.rsqrt %253 : vector<24x1xf32>
    %255 = vector.broadcast %254 : vector<24x1xf32> to vector<24x32xf32>
    %256 = arith.mulf %251, %255 : vector<24x32xf32>
    %257 = vector.broadcast %237 : vector<1x32xf32> to vector<24x32xf32>
    %258 = arith.mulf %256, %257 : vector<24x32xf32>
    %259 = vector.broadcast %238 : vector<1x32xf32> to vector<24x32xf32>
    %260 = arith.addf %258, %259 : vector<24x32xf32>
    %261 = arith.truncf %260 : vector<24x32xf32> to vector<24x32xbf16>
    %c1_101 = arith.constant 1 : index
    %c0_102 = arith.constant 0 : index
    %c0_103 = arith.constant 0 : index
    %262 = vector.load %arg12[%c1_101, %c0_102, %c0_103] : memref<2x32x128xbf16, #tpu.memory_space<vmem>>, vector<1x32x128xbf16>
    %263 = vector.shape_cast %262 : vector<1x32x128xbf16> to vector<32x128xbf16>
    %cst_104 = arith.constant dense<0.000000e+00> : vector<24x128xf32>
    %264 = tpu.matmul %261, %263, %cst_104 {dimension_numbers = #tpu.dot_dimension_numbers<[1], [0], [0], [1], [0, 0, 1, 1], [], []>} : vector<24x32xbf16>, vector<32x128xbf16>, vector<24x128xf32> -> vector<24x128xf32>
    %c1_105 = arith.constant 1 : index
    %c0_106 = arith.constant 0 : index
    %c0_107 = arith.constant 0 : index
    %265 = vector.load %arg13[%c1_105, %c0_106, %c0_107] : memref<2x1x128xf32, #tpu.memory_space<vmem>>, vector<1x1x128xf32>
    %266 = vector.shape_cast %265 : vector<1x1x128xf32> to vector<1x128xf32>
    %267 = vector.broadcast %266 : vector<1x128xf32> to vector<24x128xf32>
    %268 = arith.addf %264, %267 : vector<24x128xf32>
    %cst_108 = arith.constant 5.000000e-01 : f32
    %269 = vector.broadcast %cst_108 : f32 to vector<24x128xf32>
    %270 = arith.mulf %269, %268 : vector<24x128xf32>
    %cst_109 = arith.constant 4.471500e-02 : f32
    %271 = vector.broadcast %cst_109 : f32 to vector<24x128xf32>
    %272 = arith.mulf %271, %268 : vector<24x128xf32>
    %273 = arith.mulf %272, %268 : vector<24x128xf32>
    %274 = arith.mulf %273, %268 : vector<24x128xf32>
    %275 = arith.addf %268, %274 : vector<24x128xf32>
    %cst_110 = arith.constant 0.797884583 : f32
    %276 = vector.broadcast %cst_110 : f32 to vector<24x128xf32>
    %277 = arith.mulf %276, %275 : vector<24x128xf32>
    %278 = math.tanh %277 : vector<24x128xf32>
    %cst_111 = arith.constant 1.000000e+00 : f32
    %279 = vector.broadcast %cst_111 : f32 to vector<24x128xf32>
    %280 = arith.addf %279, %278 : vector<24x128xf32>
    %281 = arith.mulf %270, %280 : vector<24x128xf32>
    %282 = arith.truncf %281 : vector<24x128xf32> to vector<24x128xbf16>
    %c1_112 = arith.constant 1 : index
    %c0_113 = arith.constant 0 : index
    %c0_114 = arith.constant 0 : index
    %283 = vector.load %arg14[%c1_112, %c0_113, %c0_114] : memref<2x128x32xbf16, #tpu.memory_space<vmem>>, vector<1x128x32xbf16>
    %284 = vector.shape_cast %283 : vector<1x128x32xbf16> to vector<128x32xbf16>
    %cst_115 = arith.constant dense<0.000000e+00> : vector<24x32xf32>
    %285 = tpu.matmul %282, %284, %cst_115 {dimension_numbers = #tpu.dot_dimension_numbers<[1], [0], [0], [1], [0, 0, 1, 1], [], []>} : vector<24x128xbf16>, vector<128x32xbf16>, vector<24x32xf32> -> vector<24x32xf32>
    %c1_116 = arith.constant 1 : index
    %c0_117 = arith.constant 0 : index
    %c0_118 = arith.constant 0 : index
    %286 = vector.load %arg15[%c1_116, %c0_117, %c0_118] : memref<2x1x32xf32, #tpu.memory_space<vmem>>, vector<1x1x32xf32>
    %287 = vector.shape_cast %286 : vector<1x1x32xf32> to vector<1x32xf32>
    %288 = vector.broadcast %287 : vector<1x32xf32> to vector<24x32xf32>
    %289 = arith.addf %285, %288 : vector<24x32xf32>
    %290 = arith.addf %236, %289 : vector<24x32xf32>
    %291 = vector.extract_strided_slice %290 {offsets = [0, 0], sizes = [1, 32], strides = [1, 1]} : vector<24x32xf32> to vector<1x32xf32>
    %292 = vector.extract_strided_slice %0 {offsets = [2, 0], sizes = [1, 32], strides = [1, 1]} : vector<4x32xf32> to vector<1x32xf32>
    %293 = vector.extract_strided_slice %0 {offsets = [3, 0], sizes = [1, 32], strides = [1, 1]} : vector<4x32xf32> to vector<1x32xf32>
    %cst_119 = arith.constant dense<0.000000e+00> : vector<1xf32>
    %294 = vector.multi_reduction <add>, %291, %cst_119 [1] : vector<1x32xf32> to vector<1xf32>
    %295 = vector.shape_cast %294 : vector<1xf32> to vector<1x1xf32>
    %cst_120 = arith.constant 3.200000e+01 : f32
    %296 = vector.broadcast %cst_120 : f32 to vector<1x1xf32>
    %297 = arith.divf %295, %296 : vector<1x1xf32>
    %298 = vector.broadcast %297 : vector<1x1xf32> to vector<1x32xf32>
    %299 = arith.subf %291, %298 : vector<1x32xf32>
    %300 = arith.mulf %299, %299 : vector<1x32xf32>
    %cst_121 = arith.constant dense<0.000000e+00> : vector<1xf32>
    %301 = vector.multi_reduction <add>, %300, %cst_121 [1] : vector<1x32xf32> to vector<1xf32>
    %302 = vector.shape_cast %301 : vector<1xf32> to vector<1x1xf32>
    %cst_122 = arith.constant 3.200000e+01 : f32
    %303 = vector.broadcast %cst_122 : f32 to vector<1x1xf32>
    %304 = arith.divf %302, %303 : vector<1x1xf32>
    %305 = vector.broadcast %297 : vector<1x1xf32> to vector<1x32xf32>
    %306 = arith.subf %291, %305 : vector<1x32xf32>
    %cst_123 = arith.constant 9.99999974E-6 : f32
    %307 = vector.broadcast %cst_123 : f32 to vector<1x1xf32>
    %308 = arith.addf %304, %307 : vector<1x1xf32>
    %309 = math.rsqrt %308 : vector<1x1xf32>
    %310 = vector.broadcast %309 : vector<1x1xf32> to vector<1x32xf32>
    %311 = arith.mulf %306, %310 : vector<1x32xf32>
    %312 = arith.mulf %311, %292 : vector<1x32xf32>
    %313 = arith.addf %312, %293 : vector<1x32xf32>
    %314 = arith.truncf %313 : vector<1x32xf32> to vector<1x32xbf16>
    %c0_124 = arith.constant 0 : index
    %c0_125 = arith.constant 0 : index
    %315 = vector.load %arg16[%c0_124, %c0_125] : memref<32x128xbf16, #tpu.memory_space<vmem>>, vector<32x128xbf16>
    %cst_126 = arith.constant dense<0.000000e+00> : vector<1x128xf32>
    %316 = tpu.matmul %314, %315, %cst_126 {dimension_numbers = #tpu.dot_dimension_numbers<[1], [0], [0], [1], [0, 0, 1, 1], [], []>} : vector<1x32xbf16>, vector<32x128xbf16>, vector<1x128xf32> -> vector<1x128xf32>
    %317 = vector.shape_cast %316 : vector<1x128xf32> to vector<1x128xf32>
    %318 = vector.broadcast %317 : vector<1x128xf32> to vector<8x128xf32>
    %c0_127 = arith.constant 0 : index
    %c0_128 = arith.constant 0 : index
    %c0_129 = arith.constant 0 : index
    %319 = vector.load %arg17[%c0_127, %c0_128, %c0_129] : memref<1x8x128xf32, #tpu.memory_space<vmem>>, vector<1x8x128xf32>
    %320 = vector.shape_cast %319 : vector<1x8x128xf32> to vector<8x128xf32>
    %321 = vector.shape_cast %318 : vector<8x128xf32> to vector<1x8x128xf32>
    tpu.vector_store %arg17[%c0_127, %c0_128, %c0_129], %321 {strides = array<i32>} : memref<1x8x128xf32, #tpu.memory_space<vmem>>, vector<1x8x128xf32>,
    return
  }
  func.func @transform_0(%arg0: i32) -> (i32, i32, i32) {
    %c0_i32 = arith.constant 0 : i32
    %c0_i32_0 = arith.constant 0 : i32
    %c0_i32_1 = arith.constant 0 : i32
    return %arg0, %c0_i32, %c0_i32_0 : i32, i32, i32
  }
  func.func @transform_1(%arg0: i32) -> (i32, i32) {
    %c0_i32 = arith.constant 0 : i32
    %c0_i32_0 = arith.constant 0 : i32
    %c0_i32_1 = arith.constant 0 : i32
    return %c0_i32, %c0_i32_0 : i32, i32
  }
  func.func @transform_2(%arg0: i32) -> (i32, i32) {
    %c0_i32 = arith.constant 0 : i32
    %c0_i32_0 = arith.constant 0 : i32
    %c0_i32_1 = arith.constant 0 : i32
    return %c0_i32, %c0_i32_0 : i32, i32
  }
  func.func @transform_3(%arg0: i32) -> (i32, i32) {
    %c0_i32 = arith.constant 0 : i32
    %c0_i32_0 = arith.constant 0 : i32
    %c0_i32_1 = arith.constant 0 : i32
    return %c0_i32, %c0_i32_0 : i32, i32
  }
  func.func @transform_4(%arg0: i32) -> (i32, i32, i32) {
    %c0_i32 = arith.constant 0 : i32
    %c0_i32_0 = arith.constant 0 : i32
    %c0_i32_1 = arith.constant 0 : i32
    %c0_i32_2 = arith.constant 0 : i32
    return %c0_i32, %c0_i32_0, %c0_i32_1 : i32, i32, i32
  }
  func.func @transform_5(%arg0: i32) -> (i32, i32) {
    %c0_i32 = arith.constant 0 : i32
    %c0_i32_0 = arith.constant 0 : i32
    %c0_i32_1 = arith.constant 0 : i32
    return %c0_i32, %c0_i32_0 : i32, i32
  }
  func.func @transform_6(%arg0: i32) -> (i32, i32, i32) {
    %c0_i32 = arith.constant 0 : i32
    %c0_i32_0 = arith.constant 0 : i32
    %c0_i32_1 = arith.constant 0 : i32
    %c0_i32_2 = arith.constant 0 : i32
    return %c0_i32, %c0_i32_0, %c0_i32_1 : i32, i32, i32
  }
  func.func @transform_7(%arg0: i32) -> (i32, i32, i32) {
    %c0_i32 = arith.constant 0 : i32
    %c0_i32_0 = arith.constant 0 : i32
    %c0_i32_1 = arith.constant 0 : i32
    %c0_i32_2 = arith.constant 0 : i32
    return %c0_i32, %c0_i32_0, %c0_i32_1 : i32, i32, i32
  }
  func.func @transform_8(%arg0: i32) -> (i32, i32, i32) {
    %c0_i32 = arith.constant 0 : i32
    %c0_i32_0 = arith.constant 0 : i32
    %c0_i32_1 = arith.constant 0 : i32
    %c0_i32_2 = arith.constant 0 : i32
    return %c0_i32, %c0_i32_0, %c0_i32_1 : i32, i32, i32
  }
  func.func @transform_9(%arg0: i32) -> (i32, i32, i32) {
    %c0_i32 = arith.constant 0 : i32
    %c0_i32_0 = arith.constant 0 : i32
    %c0_i32_1 = arith.constant 0 : i32
    %c0_i32_2 = arith.constant 0 : i32
    return %c0_i32, %c0_i32_0, %c0_i32_1 : i32, i32, i32
  }
  func.func @transform_10(%arg0: i32) -> (i32, i32, i32) {
    %c0_i32 = arith.constant 0 : i32
    %c0_i32_0 = arith.constant 0 : i32
    %c0_i32_1 = arith.constant 0 : i32
    %c0_i32_2 = arith.constant 0 : i32
    return %c0_i32, %c0_i32_0, %c0_i32_1 : i32, i32, i32
  }
  func.func @transform_11(%arg0: i32) -> (i32, i32, i32) {
    %c0_i32 = arith.constant 0 : i32
    %c0_i32_0 = arith.constant 0 : i32
    %c0_i32_1 = arith.constant 0 : i32
    %c0_i32_2 = arith.constant 0 : i32
    return %c0_i32, %c0_i32_0, %c0_i32_1 : i32, i32, i32
  }
  func.func @transform_12(%arg0: i32) -> (i32, i32, i32) {
    %c0_i32 = arith.constant 0 : i32
    %c0_i32_0 = arith.constant 0 : i32
    %c0_i32_1 = arith.constant 0 : i32
    %c0_i32_2 = arith.constant 0 : i32
    return %c0_i32, %c0_i32_0, %c0_i32_1 : i32, i32, i32
  }
  func.func @transform_13(%arg0: i32) -> (i32, i32, i32) {
    %c0_i32 = arith.constant 0 : i32
    %c0_i32_0 = arith.constant 0 : i32
    %c0_i32_1 = arith.constant 0 : i32
    %c0_i32_2 = arith.constant 0 : i32
    return %c0_i32, %c0_i32_0, %c0_i32_1 : i32, i32, i32
  }
  func.func @transform_14(%arg0: i32) -> (i32, i32, i32) {
    %c0_i32 = arith.constant 0 : i32
    %c0_i32_0 = arith.constant 0 : i32
    %c0_i32_1 = arith.constant 0 : i32
    %c0_i32_2 = arith.constant 0 : i32
    return %c0_i32, %c0_i32_0, %c0_i32_1 : i32, i32, i32
  }
  func.func @transform_15(%arg0: i32) -> (i32, i32) {
    %c0_i32 = arith.constant 0 : i32
    %c0_i32_0 = arith.constant 0 : i32
    %c0_i32_1 = arith.constant 0 : i32
    return %c0_i32, %c0_i32_0 : i32, i32
  }
  func.func @transform_16(%arg0: i32) -> (i32, i32, i32) {
    %c0_i32 = arith.constant 0 : i32
    %c0_i32_0 = arith.constant 0 : i32
    %c0_i32_1 = arith.constant 0 : i32
    return %arg0, %c0_i32, %c0_i32_0 : i32, i32, i32
  }
}

</mosaic_0001>

<llo_original>
// kernel: clip_encode_image.1
$region0: #{clip_encode_image.1}
  #allocation0 [shape = 'u32[]', space=smem, size = 0x4, offset = 0x4, fixed_abs, tag = 'smem constant byte address 0x4 - core index']
  #allocation1 [shape = 'u32[72,128]{1,0:T(1,128)}', space=vmem, size = 0x9000, scoped, tag = 'internal scratch']
  %s0 = inlined_call_operand.vmem [shape: bf16[2,24,48], index: 0, kind: input, shape index: {}]
  %s1 = inlined_call_operand.vmem [shape: bf16[48,32], index: 1, kind: input, shape index: {}]
  %s2 = inlined_call_operand.vmem [shape: f32[24,32], index: 2, kind: input, shape index: {}]
  %s3 = inlined_call_operand.vmem [shape: f32[1,24], index: 3, kind: input, shape index: {}]
  %s4 = inlined_call_operand.vmem [shape: f32[4,1,32], index: 4, kind: input, shape index: {}]
  %s5 = inlined_call_operand.vmem [shape: f32[4,32], index: 5, kind: input, shape index: {}]
  %s6 = inlined_call_operand.vmem [shape: f32[2,4,32], index: 6, kind: input, shape index: {}]
  %s7 = inlined_call_operand.vmem [shape: bf16[2,32,96], index: 7, kind: input, shape index: {}]
  %s8 = inlined_call_operand.vmem [shape: f32[2,1,96], index: 8, kind: input, shape index: {}]
  %s9 = inlined_call_operand.vmem [shape: bf16[2,32,32], index: 9, kind: input, shape index: {}]
  %s10 = inlined_call_operand.vmem [shape: f32[2,1,32], index: 10, kind: input, shape index: {}]
  %s11 = inlined_call_operand.vmem [shape: bf16[2,32,128], index: 11, kind: input, shape index: {}]
  %s12 = inlined_call_operand.vmem [shape: f32[2,1,128], index: 12, kind: input, shape index: {}]
  %s13 = inlined_call_operand.vmem [shape: bf16[2,128,32], index: 13, kind: input, shape index: {}]
  %s14 = inlined_call_operand.vmem [shape: f32[2,1,32], index: 14, kind: input, shape index: {}]
  %s15 = inlined_call_operand.vmem [shape: bf16[32,128], index: 15, kind: input, shape index: {}]
  %s16 = inlined_call_operand.vmem [shape: f32[2,8,128], index: 16, kind: output, shape index: {}]
  %s17 = sld [smem:[#allocation0]]
  $region97: #{clip_encode_image.1} parent=0
    _
  %s19 = ssub.s32 1, %s17
  %s20 = scalar_select 0, %s19, %s17
  loop: start=0, step=1, limit=4
  $region2: #{clip_encode_image.1} parent=0 // loop_pre_header
    _
  $region3: #{clip_encode_image.1} parent=0 // loop_header
    %s22 = sphi 0, %s26
    %p23 = scmp.ge.s32.totalorder %s22, 4
    %s32 = sphi 0, %s34
    %s35 = sphi 0, %s32
    %s36 = sphi 0, %s35
    %s52 = sphi 0, %s36
    %s56 = sphi 0, %s56
    %s58 = sphi 0, %s56
    %s59 = sphi 0, %s58
    %s73 = sphi 0, %s59
    %s77 = sphi 0, %s77
    %s79 = sphi 0, %s77
    %s80 = sphi 0, %s79
    %s94 = sphi 0, %s80
    %s98 = sphi 0, %s98
    %s100 = sphi 0, %s98
    %s101 = sphi 0, %s100
    %s115 = sphi 0, %s101
    %s119 = sphi 0, %s119
    %s121 = sphi 0, %s119
    %s122 = sphi 0, %s121
    %s136 = sphi 0, %s122
    %s140 = sphi 0, %s140
    %s142 = sphi 0, %s140
    %s143 = sphi 0, %s142
    %s157 = sphi 0, %s143
    %s161 = sphi 0, %s161
    %s163 = sphi 0, %s161
    %s164 = sphi 0, %s163
    %s178 = sphi 0, %s164
    %s182 = sphi 0, %s182
    %s184 = sphi 0, %s182
    %s185 = sphi 0, %s184
    %s199 = sphi 0, %s185
    %s203 = sphi 0, %s203
    %s205 = sphi 0, %s203
    %s206 = sphi 0, %s205
    %s220 = sphi 0, %s206
    %s224 = sphi 0, %s224
    %s226 = sphi 0, %s224
    %s227 = sphi 0, %s226
    %s241 = sphi 0, %s227
    %s245 = sphi 0, %s245
    %s247 = sphi 0, %s245
    %s248 = sphi 0, %s247
    %s262 = sphi 0, %s248
    %s266 = sphi 0, %s266
    %s268 = sphi 0, %s266
    %s269 = sphi 0, %s268
    %s283 = sphi 0, %s269
    %s287 = sphi 0, %s287
    %s289 = sphi 0, %s287
    %s290 = sphi 0, %s289
    %s304 = sphi 0, %s290
    %s308 = sphi 0, %s308
    %s310 = sphi 0, %s308
    %s311 = sphi 0, %s310
    %s325 = sphi 0, %s311
    %s329 = sphi 0, %s329
    %s331 = sphi 0, %s329
    %s332 = sphi 0, %s331
    %s346 = sphi 0, %s332
    %s350 = sphi 0, %s350
    %s352 = sphi 0, %s350
    %s353 = sphi 0, %s352
    %s367 = sphi 0, %s353
    %s373 = sphi 0, %s375
    %s376 = sphi 0, %s373
    %s377 = sphi 0, %s376
    %s393 = sphi 0, %s377
  $region4: #{clip_encode_image.1} parent=0 // loop_header_branch
    %25 = sbr.rel (%p23) target = $region8
  $region5: #{clip_encode_image.1} parent=0 // loop_body
    %s27 = ssub.s32 %s22, 1
    %s28 = ssub.s32 %s22, 2
    %s29 = sadd.s32 %s22, 1
    %s30 = ssub.s32 %s22, %s29
    %p31 = scmp.eq.s32.totalorder %s30, 0
    %s33 = sadd.s32 %s32, 1
    %s34 = scalar_select %p31, %s32, %s33
    %p37 = pneg %p31
    %p38 = scmp.eq.s32.totalorder %s22, 1
    %p39 = por %p37, %p38
    %p40 = scmp.ne.s32.totalorder %s32, %s35
    %p41 = scmp.eq.s32.totalorder %s22, 0
    %p42 = por %p40, %p41
    %p43 = scmp.ne.s32.totalorder %s32, %s35
    %p44 = scmp.eq.s32.totalorder %s27, 1
    %p45 = por %p43, %p44
    %p46 = scmp.ne.s32.totalorder %s35, %s36
    %p47 = scmp.eq.s32.totalorder %s27, 0
    %p48 = por %p46, %p47
    %p49 = scmp.ne.s32.totalorder %s35, %s36
    %p50 = scmp.eq.s32.totalorder %s28, 1
    %p51 = por %p49, %p50
    %p53 = scmp.ne.s32.totalorder %s36, %s52
    %p54 = scmp.eq.s32.totalorder %s28, 0
    %p55 = por %p53, %p54
    %s57 = sadd.s32 %s56, 1
    %p60 = scmp.eq.s32.totalorder %s22, 1
    %p61 = scmp.ne.s32.totalorder %s56, %s58
    %p62 = scmp.eq.s32.totalorder %s22, 0
    %p63 = por %p61, %p62
    %p64 = scmp.ne.s32.totalorder %s56, %s58
    %p65 = scmp.eq.s32.totalorder %s27, 1
    %p66 = por %p64, %p65
    %p67 = scmp.ne.s32.totalorder %s58, %s59
    %p68 = scmp.eq.s32.totalorder %s27, 0
    %p69 = por %p67, %p68
    %p70 = scmp.ne.s32.totalorder %s58, %s59
    %p71 = scmp.eq.s32.totalorder %s28, 1
    %p72 = por %p70, %p71
    %p74 = scmp.ne.s32.totalorder %s59, %s73
    %p75 = scmp.eq.s32.totalorder %s28, 0
    %p76 = por %p74, %p75
    %s78 = sadd.s32 %s77, 1
    %p81 = scmp.eq.s32.totalorder %s22, 1
    %p82 = scmp.ne.s32.totalorder %s77, %s79
    %p83 = scmp.eq.s32.totalorder %s22, 0
    %p84 = por %p82, %p83
    %p85 = scmp.ne.s32.totalorder %s77, %s79
    %p86 = scmp.eq.s32.totalorder %s27, 1
    %p87 = por %p85, %p86
    %p88 = scmp.ne.s32.totalorder %s79, %s80
    %p89 = scmp.eq.s32.totalorder %s27, 0
    %p90 = por %p88, %p89
    %p91 = scmp.ne.s32.totalorder %s79, %s80
    %p92 = scmp.eq.s32.totalorder %s28, 1
    %p93 = por %p91, %p92
    %p95 = scmp.ne.s32.totalorder %s80, %s94
    %p96 = scmp.eq.s32.totalorder %s28, 0
    %p97 = por %p95, %p96
    %s99 = sadd.s32 %s98, 1
    %p102 = scmp.eq.s32.totalorder %s22, 1
    %p103 = scmp.ne.s32.totalorder %s98, %s100
    %p104 = scmp.eq.s32.totalorder %s22, 0
    %p105 = por %p103, %p104
    %p106 = scmp.ne.s32.totalorder %s98, %s100
    %p107 = scmp.eq.s32.totalorder %s27, 1
    %p108 = por %p106, %p107
    %p109 = scmp.ne.s32.totalorder %s100, %s101
    %p110 = scmp.eq.s32.totalorder %s27, 0
    %p111 = por %p109, %p110
    %p112 = scmp.ne.s32.totalorder %s100, %s101
    %p113 = scmp.eq.s32.totalorder %s28, 1
    %p114 = por %p112, %p113
    %p116 = scmp.ne.s32.totalorder %s101, %s115
    %p117 = scmp.eq.s32.totalorder %s28, 0
    %p118 = por %p116, %p117
    %s120 = sadd.s32 %s119, 1
    %p123 = scmp.eq.s32.totalorder %s22, 1
    %p124 = scmp.ne.s32.totalorder %s119, %s121
    %p125 = scmp.eq.s32.totalorder %s22, 0
    %p126 = por %p124, %p125
    %p127 = scmp.ne.s32.totalorder %s119, %s121
    %p128 = scmp.eq.s32.totalorder %s27, 1
    %p129 = por %p127, %p128
    %p130 = scmp.ne.s32.totalorder %s121, %s122
    %p131 = scmp.eq.s32.totalorder %s27, 0
    %p132 = por %p130, %p131
    %p133 = scmp.ne.s32.totalorder %s121, %s122
    %p134 = scmp.eq.s32.totalorder %s28, 1
    %p135 = por %p133, %p134
    %p137 = scmp.ne.s32.totalorder %s122, %s136
    %p138 = scmp.eq.s32.totalorder %s28, 0
    %p139 = por %p137, %p138
    %s141 = sadd.s32 %s140, 1
    %p144 = scmp.eq.s32.totalorder %s22, 1
    %p145 = scmp.ne.s32.totalorder %s140, %s142
    %p146 = scmp.eq.s32.totalorder %s22, 0
    %p147 = por %p145, %p146
    %p148 = scmp.ne.s32.totalorder %s140, %s142
    %p149 = scmp.eq.s32.totalorder %s27, 1
    %p150 = por %p148, %p149
    %p151 = scmp.ne.s32.totalorder %s142, %s143
    %p152 = scmp.eq.s32.totalorder %s27, 0
    %p153 = por %p151, %p152
    %p154 = scmp.ne.s32.totalorder %s142, %s143
    %p155 = scmp.eq.s32.totalorder %s28, 1
    %p156 = por %p154, %p155
    %p158 = scmp.ne.s32.totalorder %s143, %s157
    %p159 = scmp.eq.s32.totalorder %s28, 0
    %p160 = por %p158, %p159
    %s162 = sadd.s32 %s161, 1
    %p165 = scmp.eq.s32.totalorder %s22, 1
    %p166 = scmp.ne.s32.totalorder %s161, %s163
    %p167 = scmp.eq.s32.totalorder %s22, 0
    %p168 = por %p166, %p167
    %p169 = scmp.ne.s32.totalorder %s161, %s163
    %p170 = scmp.eq.s32.totalorder %s27, 1
    %p171 = por %p169, %p170
    %p172 = scmp.ne.s32.totalorder %s163, %s164
    %p173 = scmp.eq.s32.totalorder %s27, 0
    %p174 = por %p172, %p173
    %p175 = scmp.ne.s32.totalorder %s163, %s164
    %p176 = scmp.eq.s32.totalorder %s28, 1
    %p177 = por %p175, %p176
    %p179 = scmp.ne.s32.totalorder %s164, %s178
    %p180 = scmp.eq.s32.totalorder %s28, 0
    %p181 = por %p179, %p180
    %s183 = sadd.s32 %s182, 1
    %p186 = scmp.eq.s32.totalorder %s22, 1
    %p187 = scmp.ne.s32.totalorder %s182, %s184
    %p188 = scmp.eq.s32.totalorder %s22, 0
    %p189 = por %p187, %p188
    %p190 = scmp.ne.s32.totalorder %s182, %s184
    %p191 = scmp.eq.s32.totalorder %s27, 1
    %p192 = por %p190, %p191
    %p193 = scmp.ne.s32.totalorder %s184, %s185
    %p194 = scmp.eq.s32.totalorder %s27, 0
    %p195 = por %p193, %p194
    %p196 = scmp.ne.s32.totalorder %s184, %s185
    %p197 = scmp.eq.s32.totalorder %s28, 1
    %p198 = por %p196, %p197
    %p200 = scmp.ne.s32.totalorder %s185, %s199
    %p201 = scmp.eq.s32.totalorder %s28, 0
    %p202 = por %p200, %p201
    %s204 = sadd.s32 %s203, 1
    %p207 = scmp.eq.s32.totalorder %s22, 1
    %p208 = scmp.ne.s32.totalorder %s203, %s205
    %p209 = scmp.eq.s32.totalorder %s22, 0
    %p210 = por %p208, %p209
    %p211 = scmp.ne.s32.totalorder %s203, %s205
    %p212 = scmp.eq.s32.totalorder %s27, 1
    %p213 = por %p211, %p212
    %p214 = scmp.ne.s32.totalorder %s205, %s206
    %p215 = scmp.eq.s32.totalorder %s27, 0
    %p216 = por %p214, %p215
    %p217 = scmp.ne.s32.totalorder %s205, %s206
    %p218 = scmp.eq.s32.totalorder %s28, 1
    %p219 = por %p217, %p218
    %p221 = scmp.ne.s32.totalorder %s206, %s220
    %p222 = scmp.eq.s32.totalorder %s28, 0
    %p223 = por %p221, %p222
    %s225 = sadd.s32 %s224, 1
    %p228 = scmp.eq.s32.totalorder %s22, 1
    %p229 = scmp.ne.s32.totalorder %s224, %s226
    %p230 = scmp.eq.s32.totalorder %s22, 0
    %p231 = por %p229, %p230
    %p232 = scmp.ne.s32.totalorder %s224, %s226
    %p233 = scmp.eq.s32.totalorder %s27, 1
    %p234 = por %p232, %p233
    %p235 = scmp.ne.s32.totalorder %s226, %s227
    %p236 = scmp.eq.s32.totalorder %s27, 0
    %p237 = por %p235, %p236
    %p238 = scmp.ne.s32.totalorder %s226, %s227
    %p239 = scmp.eq.s32.totalorder %s28, 1
    %p240 = por %p238, %p239
    %p242 = scmp.ne.s32.totalorder %s227, %s241
    %p243 = scmp.eq.s32.totalorder %s28, 0
    %p244 = por %p242, %p243
    %s246 = sadd.s32 %s245, 1
    %p249 = scmp.eq.s32.totalorder %s22, 1
    %p250 = scmp.ne.s32.totalorder %s245, %s247
    %p251 = scmp.eq.s32.totalorder %s22, 0
    %p252 = por %p250, %p251
    %p253 = scmp.ne.s32.totalorder %s245, %s247
    %p254 = scmp.eq.s32.totalorder %s27, 1
    %p255 = por %p253, %p254
    %p256 = scmp.ne.s32.totalorder %s247, %s248
    %p257 = scmp.eq.s32.totalorder %s27, 0
    %p258 = por %p256, %p257
    %p259 = scmp.ne.s32.totalorder %s247, %s248
    %p260 = scmp.eq.s32.totalorder %s28, 1
    %p261 = por %p259, %p260
    %p263 = scmp.ne.s32.totalorder %s248, %s262
    %p264 = scmp.eq.s32.totalorder %s28, 0
    %p265 = por %p263, %p264
    %s267 = sadd.s32 %s266, 1
    %p270 = scmp.eq.s32.totalorder %s22, 1
    %p271 = scmp.ne.s32.totalorder %s266, %s268
    %p272 = scmp.eq.s32.totalorder %s22, 0
    %p273 = por %p271, %p272
    %p274 = scmp.ne.s32.totalorder %s266, %s268
    %p275 = scmp.eq.s32.totalorder %s27, 1
    %p276 = por %p274, %p275
    %p277 = scmp.ne.s32.totalorder %s268, %s269
    %p278 = scmp.eq.s32.totalorder %s27, 0
    %p279 = por %p277, %p278
    %p280 = scmp.ne.s32.totalorder %s268, %s269
    %p281 = scmp.eq.s32.totalorder %s28, 1
    %p282 = por %p280, %p281
    %p284 = scmp.ne.s32.totalorder %s269, %s283
    %p285 = scmp.eq.s32.totalorder %s28, 0
    %p286 = por %p284, %p285
    %s288 = sadd.s32 %s287, 1
    %p291 = scmp.eq.s32.totalorder %s22, 1
    %p292 = scmp.ne.s32.totalorder %s287, %s289
    %p293 = scmp.eq.s32.totalorder %s22, 0
    %p294 = por %p292, %p293
    %p295 = scmp.ne.s32.totalorder %s287, %s289
    %p296 = scmp.eq.s32.totalorder %s27, 1
    %p297 = por %p295, %p296
    %p298 = scmp.ne.s32.totalorder %s289, %s290
    %p299 = scmp.eq.s32.totalorder %s27, 0
    %p300 = por %p298, %p299
    %p301 = scmp.ne.s32.totalorder %s289, %s290
    %p302 = scmp.eq.s32.totalorder %s28, 1
    %p303 = por %p301, %p302
    %p305 = scmp.ne.s32.totalorder %s290, %s304
    %p306 = scmp.eq.s32.totalorder %s28, 0
    %p307 = por %p305, %p306
    %s309 = sadd.s32 %s308, 1
    %p312 = scmp.eq.s32.totalorder %s22, 1
    %p313 = scmp.ne.s32.totalorder %s308, %s310
    %p314 = scmp.eq.s32.totalorder %s22, 0
    %p315 = por %p313, %p314
    %p316 = scmp.ne.s32.totalorder %s308, %s310
    %p317 = scmp.eq.s32.totalorder %s27, 1
    %p318 = por %p316, %p317
    %p319 = scmp.ne.s32.totalorder %s310, %s311
    %p320 = scmp.eq.s32.totalorder %s27, 0
    %p321 = por %p319, %p320
    %p322 = scmp.ne.s32.totalorder %s310, %s311
    %p323 = scmp.eq.s32.totalorder %s28, 1
    %p324 = por %p322, %p323
    %p326 = scmp.ne.s32.totalorder %s311, %s325
    %p327 = scmp.eq.s32.totalorder %s28, 0
    %p328 = por %p326, %p327
    %s330 = sadd.s32 %s329, 1
    %p333 = scmp.eq.s32.totalorder %s22, 1
    %p334 = scmp.ne.s32.totalorder %s329, %s331
    %p335 = scmp.eq.s32.totalorder %s22, 0
    %p336 = por %p334, %p335
    %p337 = scmp.ne.s32.totalorder %s329, %s331
    %p338 = scmp.eq.s32.totalorder %s27, 1
    %p339 = por %p337, %p338
    %p340 = scmp.ne.s32.totalorder %s331, %s332
    %p341 = scmp.eq.s32.totalorder %s27, 0
    %p342 = por %p340, %p341
    %p343 = scmp.ne.s32.totalorder %s331, %s332
    %p344 = scmp.eq.s32.totalorder %s28, 1
    %p345 = por %p343, %p344
    %p347 = scmp.ne.s32.totalorder %s332, %s346
    %p348 = scmp.eq.s32.totalorder %s28, 0
    %p349 = por %p347, %p348
    %s351 = sadd.s32 %s350, 1
    %p354 = scmp.eq.s32.totalorder %s22, 1
    %p355 = scmp.ne.s32.totalorder %s350, %s352
    %p356 = scmp.eq.s32.totalorder %s22, 0
    %p357 = por %p355, %p356
    %p358 = scmp.ne.s32.totalorder %s350, %s352
    %p359 = scmp.eq.s32.totalorder %s27, 1
    %p360 = por %p358, %p359
    %p361 = scmp.ne.s32.totalorder %s352, %s353
    %p362 = scmp.eq.s32.totalorder %s27, 0
    %p363 = por %p361, %p362
    %p364 = scmp.ne.s32.totalorder %s352, %s353
    %p365 = scmp.eq.s32.totalorder %s28, 1
    %p366 = por %p364, %p365
    %p368 = scmp.ne.s32.totalorder %s353, %s367
    %p369 = scmp.eq.s32.totalorder %s28, 0
    %p370 = por %p368, %p369
    %s371 = ssub.s32 %s22, %s29
    %p372 = scmp.eq.s32.totalorder %s371, 0
    %s374 = sadd.s32 %s373, 1
    %s375 = scalar_select %p372, %s373, %s374
    %p378 = pneg %p372
    %p379 = scmp.eq.s32.totalorder %s22, 1
    %p380 = por %p378, %p379
    %p381 = scmp.ne.s32.totalorder %s373, %s376
    %p382 = scmp.eq.s32.totalorder %s22, 0
    %p383 = por %p381, %p382
    %p384 = scmp.ne.s32.totalorder %s373, %s376
    %p385 = scmp.eq.s32.totalorder %s27, 1
    %p386 = por %p384, %p385
    %p387 = scmp.ne.s32.totalorder %s376, %s377
    %p388 = scmp.eq.s32.totalorder %s27, 0
    %p389 = por %p387, %p388
    %p390 = scmp.ne.s32.totalorder %s376, %s377
    %p391 = scmp.eq.s32.totalorder %s28, 1
    %p392 = por %p390, %p391
    %p394 = scmp.ne.s32.totalorder %s377, %s393
    %p395 = scmp.eq.s32.totalorder %s28, 0
    %p396 = por %p394, %p395
    %p397 = scmp.le.s32.totalorder 1, %s22
    %p398 = scmp.lt.s32.totalorder %s22, 3
    %p399 = pnand %p397, %p398
    %p400 = pneg %p399
    // Predicated region
    $region9: #{clip_encode_image.1} parent=5 // pred_check
      _
    $region10: #{clip_encode_image.1} parent=5 // pred_check_branch
      %402 = sbr.rel (%p399) target = $region12
    $region11: #{clip_encode_image.1} parent=5 // pred_region
      %s403 = ssub.s32 %s22, 1
      // Predicated region
      $region13: #{clip_encode_image.1} parent=11 // pred_check
        %p404 = pneg %p69
      $region14: #{clip_encode_image.1} parent=11 // pred_check_branch
        %406 = sbr.rel (%p404) target = $region16
      $region15: #{clip_encode_image.1} parent=11 // pred_region
        _
      $region16: #{clip_encode_image.1} parent=11 // pred_fallthru
        _
      // Predicated region
      $region17: #{clip_encode_image.1} parent=11 // pred_check
        %p407 = pneg %p90
      $region18: #{clip_encode_image.1} parent=11 // pred_check_branch
        %409 = sbr.rel (%p407) target = $region20
      $region19: #{clip_encode_image.1} parent=11 // pred_region
        _
      $region20: #{clip_encode_image.1} parent=11 // pred_fallthru
        _
      // Predicated region
      $region21: #{clip_encode_image.1} parent=11 // pred_check
        %p410 = pneg %p111
      $region22: #{clip_encode_image.1} parent=11 // pred_check_branch
        %412 = sbr.rel (%p410) target = $region24
      $region23: #{clip_encode_image.1} parent=11 // pred_region
        _
      $region24: #{clip_encode_image.1} parent=11 // pred_fallthru
        _
      // Predicated region
      $region25: #{clip_encode_image.1} parent=11 // pred_check
        %p413 = pneg %p132
      $region26: #{clip_encode_image.1} parent=11 // pred_check_branch
        %415 = sbr.rel (%p413) target = $region28
      $region27: #{clip_encode_image.1} parent=11 // pred_region
        _
      $region28: #{clip_encode_image.1} parent=11 // pred_fallthru
        _
      // Predicated region
      $region29: #{clip_encode_image.1} parent=11 // pred_check
        %p416 = pneg %p153
      $region30: #{clip_encode_image.1} parent=11 // pred_check_branch
        %418 = sbr.rel (%p416) target = $region32
      $region31: #{clip_encode_image.1} parent=11 // pred_region
        _
      $region32: #{clip_encode_image.1} parent=11 // pred_fallthru
        _
      // Predicated region
      $region33: #{clip_encode_image.1} parent=11 // pred_check
        %p419 = pneg %p174
      $region34: #{clip_encode_image.1} parent=11 // pred_check_branch
        %421 = sbr.rel (%p419) target = $region36
      $region35: #{clip_encode_image.1} parent=11 // pred_region
        _
      $region36: #{clip_encode_image.1} parent=11 // pred_fallthru
        _
      // Predicated region
      $region37: #{clip_encode_image.1} parent=11 // pred_check
        %p422 = pneg %p195
      $region38: #{clip_encode_image.1} parent=11 // pred_check_branch
        %424 = sbr.rel (%p422) target = $region40
      $region39: #{clip_encode_image.1} parent=11 // pred_region
        _
      $region40: #{clip_encode_image.1} parent=11 // pred_fallthru
        _
      // Predicated region
      $region41: #{clip_encode_image.1} parent=11 // pred_check
        %p425 = pneg %p216
      $region42: #{clip_encode_image.1} parent=11 // pred_check_branch
        %427 = sbr.rel (%p425) target = $region44
      $region43: #{clip_encode_image.1} parent=11 // pred_region
        _
      $region44: #{clip_encode_image.1} parent=11 // pred_fallthru
        _
      // Predicated region
      $region45: #{clip_encode_image.1} parent=11 // pred_check
        %p428 = pneg %p237
      $region46: #{clip_encode_image.1} parent=11 // pred_check_branch
        %430 = sbr.rel (%p428) target = $region48
      $region47: #{clip_encode_image.1} parent=11 // pred_region
        _
      $region48: #{clip_encode_image.1} parent=11 // pred_fallthru
        _
      // Predicated region
      $region49: #{clip_encode_image.1} parent=11 // pred_check
        %p431 = pneg %p258
      $region50: #{clip_encode_image.1} parent=11 // pred_check_branch
        %433 = sbr.rel (%p431) target = $region52
      $region51: #{clip_encode_image.1} parent=11 // pred_region
        _
      $region52: #{clip_encode_image.1} parent=11 // pred_fallthru
        _
      // Predicated region
      $region53: #{clip_encode_image.1} parent=11 // pred_check
        %p434 = pneg %p279
      $region54: #{clip_encode_image.1} parent=11 // pred_check_branch
        %436 = sbr.rel (%p434) target = $region56
      $region55: #{clip_encode_image.1} parent=11 // pred_region
        _
      $region56: #{clip_encode_image.1} parent=11 // pred_fallthru
        _
      // Predicated region
      $region57: #{clip_encode_image.1} parent=11 // pred_check
        %p437 = pneg %p300
      $region58: #{clip_encode_image.1} parent=11 // pred_check_branch
        %439 = sbr.rel (%p437) target = $region60
      $region59: #{clip_encode_image.1} parent=11 // pred_region
        _
      $region60: #{clip_encode_image.1} parent=11 // pred_fallthru
        _
      // Predicated region
      $region61: #{clip_encode_image.1} parent=11 // pred_check
        %p440 = pneg %p321
      $region62: #{clip_encode_image.1} parent=11 // pred_check_branch
        %442 = sbr.rel (%p440) target = $region64
      $region63: #{clip_encode_image.1} parent=11 // pred_region
        _
      $region64: #{clip_encode_image.1} parent=11 // pred_fallthru
        _
      // Predicated region
      $region65: #{clip_encode_image.1} parent=11 // pred_check
        %p443 = pneg %p342
      $region66: #{clip_encode_image.1} parent=11 // pred_check_branch
        %445 = sbr.rel (%p443) target = $region68
      $region67: #{clip_encode_image.1} parent=11 // pred_region
        _
      $region68: #{clip_encode_image.1} parent=11 // pred_fallthru
        _
      // Predicated region
      $region69: #{clip_encode_image.1} parent=11 // pred_check
        %p446 = pneg %p363
      $region70: #{clip_encode_image.1} parent=11 // pred_check_branch
        %448 = sbr.rel (%p446) target = $region72
      $region71: #{clip_encode_image.1} parent=11 // pred_region
        _
      $region72: #{clip_encode_image.1} parent=11 // pred_fallthru
        _
    $region12: #{clip_encode_image.1} parent=5 // pred_fallthru
      _
    %p449 = scmp.lt.s32.totalorder %s22, 2
    // Predicated region
    $region73: #{clip_encode_image.1} parent=5 // pred_check
      %p450 = pneg %p449
    $region74: #{clip_encode_image.1} parent=5 // pred_check_branch
      %452 = sbr.rel (%p450) target = $region76
    $region75: #{clip_encode_image.1} parent=5 // pred_region
      // Predicated region
      $region77: #{clip_encode_image.1} parent=75 // pred_check
        %p453 = pneg %p42
      $region78: #{clip_encode_image.1} parent=75 // pred_check_branch
        %455 = sbr.rel (%p453) target = $region80
      $region79: #{clip_encode_image.1} parent=75 // pred_region
        %p456 = scmp.lt.s32.totalorder %s22, 1
        %s457 = scalar_select %p456, %s22, 1
        %s458 = smul.addr %s457, 3
        %s459 = smul.addr %s458, 4
        %s460 = scalar_lea.vmem %s0, %s459
      $region80: #{clip_encode_image.1} parent=75 // pred_fallthru
        _
    $region76: #{clip_encode_image.1} parent=5 // pred_fallthru
      _
    %p461 = scmp.le.s32.totalorder 1, %s22
    %p462 = scmp.lt.s32.totalorder %s22, 3
    %p463 = pnand %p461, %p462
    %p464 = pneg %p463
    // Predicated region
    $region81: #{clip_encode_image.1} parent=5 // pred_check
      _
    $region82: #{clip_encode_image.1} parent=5 // pred_check_branch
      %466 = sbr.rel (%p463) target = $region84
    $region83: #{clip_encode_image.1} parent=5 // pred_region
      %s467 = ssub.s32 %s22, 1
      %p468 = scmp.lt.s32.totalorder %s27, 1
      %s469 = scalar_select %p468, %s27, 1
      %s470 = smul.addr %s469, 3
      %s471 = smul.addr %s470, 4
      %s472 = scalar_lea.vmem %s0, %s471
      %p473 = pneg %p48
      %p474 = pneg %p45
      %p475 = pneg %p69
      %p476 = pneg %p66
      %p477 = pneg %p90
      %p478 = pneg %p87
      %p479 = pneg %p111
      %p480 = pneg %p108
      %p481 = pneg %p132
      %p482 = pneg %p129
      %p483 = pneg %p153
      %p484 = pneg %p150
      %p485 = pneg %p174
      %p486 = pneg %p171
      %p487 = pneg %p195
      %p488 = pneg %p192
      %p489 = pneg %p216
      %p490 = pneg %p213
      %p491 = pneg %p237
      %p492 = pneg %p234
      %p493 = pneg %p258
      %p494 = pneg %p255
      %p495 = pneg %p279
      %p496 = pneg %p276
      %p497 = pneg %p300
      %p498 = pneg %p297
      %p499 = pneg %p321
      %p500 = pneg %p318
      %p501 = pneg %p342
      %p502 = pneg %p339
      %p503 = pneg %p363
      %p504 = pneg %p360
      %p505 = pneg %p389
      %p506 = pneg %p386
      %p507 = scmp.lt.s32.totalorder %s27, 1
      %s508 = scalar_select %p507, %s27, 1
      %s509 = smul.addr %s508, 8
      %s510 = scalar_lea.vmem %s16, %s509
      %p511 = scmp.lt.s32.totalorder %s27, 1
      %s512 = scalar_select %p511, %s27, 1
      %s513 = smul.addr %s512, 3
      %s514 = smul.addr %s513, 4
      %s515 = scalar_lea.vmem %s0, %s514
      %p516 = scmp.lt.s32.totalorder %s27, 1
      %s517 = scalar_select %p516, %s27, 1
      %s518 = smul.addr %s517, 8
      %s519 = scalar_lea.vmem %s16, %s518
      %v521 = vld [vmem:[%s5] sm:$0xf]
      %v522 = vld [vmem:[%s3] sm:$0x1]
      %v523 = vld [vmem:[%s4] sm:$0x1]
      %v524 = vld [vmem:[%s4 + $0x1] sm:$0x1]
      %v525 = vld [vmem:[%s4 + $0x2] sm:$0x1]
      %v526 = vld [vmem:[%s4 + $0x3] sm:$0x1]
      %v527 = vld [vmem:[%s515] sm:$0xf]
      %v528 = vld [vmem:[%s515 + $0x4] sm:$0xf]
      %v529 = vld [vmem:[%s515 + $0x8] sm:$0xf]
      %v530 = vld [vmem:[%s1] sm:$0xf]
      %v531 = vld [vmem:[%s1 + $0x4] sm:$0xf]
      %v532 = vld [vmem:[%s1 + $0x8] sm:$0xf]
      %v533 = vld [vmem:[%s1 + $0xc] sm:$0xf]
      %v534 = vld [vmem:[%s1 + $0x10] sm:$0xf]
      %v535 = vld [vmem:[%s1 + $0x14] sm:$0xf]
      %v536 = vld [vmem:[%s2] sm:$0xff]
      %v537 = vld [vmem:[%s2 + $0x8] sm:$0xff]
      %v538 = vld [vmem:[%s2 + $0x10] sm:$0xff]
      %v542 = vunpack.c.l.b16 %v527
      %v543 = vunpack.c.l.b16 %v528
      %v544 = vunpack.c.l.b16 %v529
      %v545 = vpack.c.b16 %v543, %v542
      %v546 = vpack.c.b16 %v544, %v544
      %v553 = vunpack.c.l.b16 %v530
      %v554 = vunpack.c.l.b16 %v531
      %v555 = vunpack.c.l.b16 %v532
      %v556 = vunpack.c.l.b16 %v533
      %v557 = vunpack.c.l.b16 %v534
      %v558 = vunpack.c.l.b16 %v535
      %v559 = vpack.c.b16 %v554, %v553
      %v560 = vpack.c.b16 %v556, %v555
      %v561 = vpack.c.b16 %v558, %v557
      %vm565 = vcmask 392192
      %v567 = vsel %vm565, %v545, 0
      %v570 = vsel %vm565, %v546, 0
      %572 = vmatpush.bf16.msra.mxu0 0
      %573 = vmatpush.bf16.msra.mxu0 0
      %574 = vmatpush.bf16.msra.mxu0 0
      %575 = vmatpush.bf16.msra.mxu0 0
      %576 = vmatpush.bf16.msra.mxu0 0
      %577 = vmatpush.bf16.msra.mxu0 %v561
      %578 = vmatpush.bf16.msra.mxu0 %v560
      %579 = vmatpush.bf16.msra.mxu0 %v559
      %580 = vmatmul.bf16.gmra.mxu0 %v567
      %v581 = vpop.f32.mrf.mxu0
      %v582 = vadd.f32 %v536, %v581
      %v583 = vpop.f32.mrf.mxu0
      %v584 = vadd.f32 %v537, %v583
      %585 = vmatmul.bf16.gmra.mxu0 %v570
      %v586 = vpop.f32.mrf.mxu0
      %v587 = vadd.f32 %v538, %v586
      %v588 = vpop.f32.mrf.mxu0
      %589 = vdwg.mxu0
      %vm590 = vcmask 261120
      %v591 = vsel %vm590, %v582, 0.0
      %592 = vadd.xlane.f32.xlu0 %v591
      %v593 = vpop.xlane.xlu0 %592
      %v594 = vsel %vm590, %v584, 0.0
      %595 = vadd.xlane.f32.xlu0 %v594
      %v596 = vpop.xlane.xlu0 %595
      %v597 = vsel %vm590, %v587, 0.0
      %598 = vadd.xlane.f32.xlu0 %v597
      %v599 = vpop.xlane.xlu0 %598
      %v600 = vrcp.pop 32.0
      %v601 = vmul.f32 32.0, %v600
      %v602 = vsub.f32 1.0, %v601
      %v603 = vmul.f32 %v600, %v602
      %v604 = vadd.f32 %v600, %v603
      %vm605 = vweird.f32 %v600
      %v606 = vsel %vm605, %v600, %v604
      %v607 = vmul.f32 %v593, %v606
      %v608 = vmul.f32 %v596, %v606
      %v609 = vmul.f32 %v599, %v606
      %v610 = vsub.f32 %v582, %v607
      %v611 = vsub.f32 %v584, %v608
      %v612 = vsub.f32 %v587, %v609
      %v613 = vmul.f32 %v610, %v610
      %v614 = vmul.f32 %v611, %v611
      %v615 = vmul.f32 %v612, %v612
      %v616 = vsel %vm590, %v613, 0.0
      %617 = vadd.xlane.f32.xlu0 %v616
      %v618 = vpop.xlane.xlu0 %617
      %v619 = vsel %vm590, %v614, 0.0
      %620 = vadd.xlane.f32.xlu0 %v619
      %v621 = vpop.xlane.xlu0 %620
      %v622 = vsel %vm590, %v615, 0.0
      %623 = vadd.xlane.f32.xlu0 %v622
      %v624 = vpop.xlane.xlu0 %623
      %v625 = vmul.f32 %v618, %v606
      %v626 = vmul.f32 %v621, %v606
      %v627 = vmul.f32 %v624, %v606
      %v628 = vadd.f32 %v625, 1e-05
      %v629 = vadd.f32 %v626, 1e-05
      %v630 = vadd.f32 %v627, 1e-05
      %v631 = vrsqrt.pop %v628
      %v632 = vmul.f32 %v631, %v628
      %v633 = vmul.f32 %v632, %v631
      %v634 = vmul.f32 0.5, %v633
      %v635 = vsub.f32 1.5, %v634
      %v636 = vmul.f32 %v631, %v635
      %vm637 = vweird.f32 %v628
      %vm638 = vweird.f32 %v631
      %vm639 = vmor %vm637, %vm638
      %v640 = vsel %vm639, %v631, %v636
      %v641 = vrsqrt.pop %v629
      %v642 = vmul.f32 %v641, %v629
      %v643 = vmul.f32 %v642, %v641
      %v644 = vmul.f32 0.5, %v643
      %v645 = vsub.f32 1.5, %v644
      %v646 = vmul.f32 %v641, %v645
      %vm647 = vweird.f32 %v629
      %vm648 = vweird.f32 %v641
      %vm649 = vmor %vm647, %vm648
      %v650 = vsel %vm649, %v641, %v646
      %v651 = vrsqrt.pop %v630
      %v652 = vmul.f32 %v651, %v630
      %v653 = vmul.f32 %v652, %v651
      %v654 = vmul.f32 0.5, %v653
      %v655 = vsub.f32 1.5, %v654
      %v656 = vmul.f32 %v651, %v655
      %vm657 = vweird.f32 %v630
      %vm658 = vweird.f32 %v651
      %vm659 = vmor %vm657, %vm658
      %v660 = vsel %vm659, %v651, %v656
      %v661 = vmul.f32 %v610, %v640
      %v662 = vmul.f32 %v611, %v650
      %v663 = vmul.f32 %v612, %v660
      %v664 = vperm.slane %v521, 0
      %v665 = vmul.f32 %v661, %v664
      %v666 = vmul.f32 %v662, %v664
      %v667 = vmul.f32 %v663, %v664
      %v668 = vperm.slane %v521, 1
      %v669 = vadd.f32 %v665, %v668
      %v670 = vadd.f32 %v666, %v668
      %v671 = vadd.f32 %v667, %v668
      %v672 = vld [vmem:[%s6] sm:$0xf]
      %v673 = vsel %vm590, %v669, 0.0
      %674 = vadd.xlane.f32.xlu0 %v673
      %v675 = vpop.xlane.xlu0 %674
      %v676 = vsel %vm590, %v670, 0.0
      %677 = vadd.xlane.f32.xlu0 %v676
      %v678 = vpop.xlane.xlu0 %677
      %v679 = vsel %vm590, %v671, 0.0
      %680 = vadd.xlane.f32.xlu0 %v679
      %v681 = vpop.xlane.xlu0 %680
      %v682 = vmul.f32 %v675, %v606
      %v683 = vmul.f32 %v678, %v606
      %v684 = vmul.f32 %v681, %v606
      %v685 = vsub.f32 %v669, %v682
      %v686 = vsub.f32 %v670, %v683
      %v687 = vsub.f32 %v671, %v684
      %v688 = vmul.f32 %v685, %v685
      %v689 = vmul.f32 %v686, %v686
      %v690 = vmul.f32 %v687, %v687
      %v691 = vsel %vm590, %v688, 0.0
      %692 = vadd.xlane.f32.xlu0 %v691
      %v693 = vpop.xlane.xlu0 %692
      %v694 = vsel %vm590, %v689, 0.0
      %695 = vadd.xlane.f32.xlu0 %v694
      %v696 = vpop.xlane.xlu0 %695
      %v697 = vsel %vm590, %v690, 0.0
      %698 = vadd.xlane.f32.xlu0 %v697
      %v699 = vpop.xlane.xlu0 %698
      %v700 = vmul.f32 %v693, %v606
      %v701 = vmul.f32 %v696, %v606
      %v702 = vmul.f32 %v699, %v606
      %v703 = vadd.f32 %v700, 1e-05
      %v704 = vadd.f32 %v701, 1e-05
      %v705 = vadd.f32 %v702, 1e-05
      %v706 = vrsqrt.pop %v703
      %v707 = vmul.f32 %v706, %v703
      %v708 = vmul.f32 %v707, %v706
      %v709 = vmul.f32 0.5, %v708
      %v710 = vsub.f32 1.5, %v709
      %v711 = vmul.f32 %v706, %v710
      %vm712 = vweird.f32 %v703
      %vm713 = vweird.f32 %v706
      %vm714 = vmor %vm712, %vm713
      %v715 = vsel %vm714, %v706, %v711
      %v716 = vrsqrt.pop %v704
      %v717 = vmul.f32 %v716, %v704
      %v718 = vmul.f32 %v717, %v716
      %v719 = vmul.f32 0.5, %v718
      %v720 = vsub.f32 1.5, %v719
      %v721 = vmul.f32 %v716, %v720
      %vm722 = vweird.f32 %v704
      %vm723 = vweird.f32 %v716
      %vm724 = vmor %vm722, %vm723
      %v725 = vsel %vm724, %v716, %v721
      %v726 = vrsqrt.pop %v705
      %v727 = vmul.f32 %v726, %v705
      %v728 = vmul.f32 %v727, %v726
      %v729 = vmul.f32 0.5, %v728
      %v730 = vsub.f32 1.5, %v729
      %v731 = vmul.f32 %v726, %v730
      %vm732 = vweird.f32 %v705
      %vm733 = vweird.f32 %v726
      %vm734 = vmor %vm732, %vm733
      %v735 = vsel %vm734, %v726, %v731
      %v736 = vmul.f32 %v685, %v715
      %v737 = vmul.f32 %v686, %v725
      %v738 = vmul.f32 %v687, %v735
      %v739 = vperm.slane %v672, 0
      %v740 = vmul.f32 %v736, %v739
      %v741 = vmul.f32 %v737, %v739
      %v742 = vmul.f32 %v738, %v739
      %v743 = vperm.slane %v672, 1
      %v744 = vadd.f32 %v740, %v743
      %v745 = vadd.f32 %v741, %v743
      %v746 = vadd.f32 %v742, %v743
      %v747 = vpack.c.bf16 %v745, %v744
      %v748 = vpack.c.bf16 %v746, %v746
      %v749 = vld [vmem:[%s7] sm:$0xf]
      %v750 = vld [vmem:[%s7 + $0x4] sm:$0xf]
      %v751 = vld [vmem:[%s7 + $0x8] sm:$0xf]
      %v752 = vld [vmem:[%s7 + $0xc] sm:$0xf]
      %v753 = vld [vmem:[%s8] sm:$0x1]
      %v755 = vperm.slane %v753, 0
      %v761 = vunpack.c.l.b16 %v749
      %v762 = vunpack.c.l.b16 %v750
      %v763 = vunpack.c.l.b16 %v751
      %v764 = vunpack.c.l.b16 %v752
      %v765 = vpack.c.b16 %v762, %v761
      %v766 = vpack.c.b16 %v764, %v763
      %v770 = vsel %vm590, %v747, 0
      %v773 = vsel %vm590, %v748, 0
      %775 = vmatpush.bf16.msra.mxu0 0
      %776 = vmatpush.bf16.msra.mxu0 0
      %777 = vmatpush.bf16.msra.mxu0 0
      %778 = vmatpush.bf16.msra.mxu0 0
      %779 = vmatpush.bf16.msra.mxu0 0
      %780 = vmatpush.bf16.msra.mxu0 0
      %781 = vmatpush.bf16.msra.mxu0 %v766
      %782 = vmatpush.bf16.msra.mxu0 %v765
      %783 = vmatmul.bf16.gmra.mxu0 %v770
      %v784 = vpop.f32.mrf.mxu0
      %v785 = vadd.f32 %v755, %v784
      %v786 = vpop.f32.mrf.mxu0
      %v787 = vadd.f32 %v755, %v786
      %788 = vmatmul.bf16.gmra.mxu0 %v773
      %v789 = vpop.f32.mrf.mxu0
      %v790 = vadd.f32 %v755, %v789
      %v791 = vpop.f32.mrf.mxu0
      %792 = vdwg.mxu0
      %v793 = vmul.f32 %v785, 0.35355338
      %v794 = vmul.f32 %v787, 0.35355338
      %v795 = vmul.f32 %v790, 0.35355338
      %v796 = vpack.c.bf16 %v794, %v793
      %v797 = vpack.c.bf16 %v795, %v795
      %v798 = vpack.c.bf16 %v787, %v785
      %v799 = vpack.c.bf16 %v790, %v790
      %v804 = vperm.slane %v523, 0
      %v805 = vperm.slane %v524, 0
      %v806 = vperm.slane %v525, 0
      %v807 = vperm.slane %v526, 0
      %v812 = vmul.f32 %v785, %v804
      %v813 = vmul.f32 %v787, %v804
      %v814 = vmul.f32 %v790, %v804
      %v815 = vmul.f32 %v785, %v805
      %v816 = vmul.f32 %v787, %v805
      %v817 = vmul.f32 %v790, %v805
      %v818 = vmul.f32 %v785, %v806
      %v819 = vmul.f32 %v787, %v806
      %v820 = vmul.f32 %v790, %v806
      %v821 = vmul.f32 %v785, %v807
      %v822 = vmul.f32 %v787, %v807
      %v823 = vmul.f32 %v790, %v807
      %v824 = vpack.c.bf16 %v813, %v812
      %v825 = vpack.c.bf16 %v815, %v814
      %v826 = vpack.c.bf16 %v817, %v816
      %v827 = vpack.c.bf16 %v819, %v818
      %v828 = vpack.c.bf16 %v821, %v820
      %v829 = vpack.c.bf16 %v823, %v822
      %v831 = vperm.slane %v522, 0
      %835 = vrot.lane.b32.xlu0 %v796, 96
      %v836 = vpop.permute.xlu0 %835
      %837 = vrot.lane.b32.xlu0 %v797, 96
      %v838 = vpop.permute.xlu0 %837
      %v840 = vsel %vm590, %v824, 0
      %v843 = vsel %vm590, %v825, 0
      %v846 = vsel %vm590, %v826, 0
      %v849 = vsel %vm590, %v827, 0
      %v852 = vsel %vm590, %v828, 0
      %v855 = vsel %vm590, %v829, 0
      %v858 = vsel %vm590, %v836, 0
      %v861 = vsel %vm590, %v838, 0
      %863 = vmatpush.bf16.xpose.msra.mxu0 0
      %864 = vmatpush.bf16.xpose.msra.mxu0 0
      %865 = vmatpush.bf16.xpose.msra.mxu0 0
      %866 = vmatpush.bf16.xpose.msra.mxu0 0
      %867 = vmatpush.bf16.xpose.msra.mxu0 0
      %868 = vmatpush.bf16.xpose.msra.mxu0 0
      %869 = vmatpush.bf16.xpose.msra.mxu0 %v861
      %870 = vmatpush.bf16.xpose.msra.mxu0 %v858
      %871 = vmatmul.bf16.gmra.mxu0 %v840
      %v872 = vpop.f32.mrf.mxu0
      %v873 = vadd.f32 %v831, %v872
      %v874 = vpop.f32.mrf.mxu0
      %v875 = vadd.f32 %v831, %v874
      %876 = vmatmul.bf16.gmra.mxu0 %v843
      %v877 = vpop.f32.mrf.mxu0
      %v878 = vadd.f32 %v831, %v877
      %v879 = vpop.f32.mrf.mxu0
      %v880 = vadd.f32 %v831, %v879
      %881 = vmatmul.bf16.gmra.mxu0 %v846
      %v882 = vpop.f32.mrf.mxu0
      %v883 = vadd.f32 %v831, %v882
      %v884 = vpop.f32.mrf.mxu0
      %v885 = vadd.f32 %v831, %v884
      %886 = vmatmul.bf16.gmra.mxu0 %v849
      %v887 = vpop.f32.mrf.mxu0
      %v888 = vadd.f32 %v831, %v887
      %v889 = vpop.f32.mrf.mxu0
      %v890 = vadd.f32 %v831, %v889
      %891 = vmatmul.bf16.gmra.mxu0 %v852
      %v892 = vpop.f32.mrf.mxu0
      %v893 = vadd.f32 %v831, %v892
      %v894 = vpop.f32.mrf.mxu0
      %v895 = vadd.f32 %v831, %v894
      %896 = vmatmul.bf16.gmra.mxu0 %v855
      %v897 = vpop.f32.mrf.mxu0
      %v898 = vadd.f32 %v831, %v897
      %v899 = vpop.f32.mrf.mxu0
      %v900 = vadd.f32 %v831, %v899
      %901 = vdwg.mxu0
      %vm902 = vcmask 195584
      %v903 = vsel %vm902, %v873, -inf
      %904 = vmax.xlane.f32.xlu0 %v903
      %v905 = vpop.xlane.xlu0 %904
      %v906 = vsel %vm902, %v875, -inf
      %907 = vmax.xlane.f32.xlu0 %v906
      %v908 = vpop.xlane.xlu0 %907
      %v909 = vsel %vm902, %v878, -inf
      %910 = vmax.xlane.f32.xlu0 %v909
      %v911 = vpop.xlane.xlu0 %910
      %v912 = vsel %vm902, %v880, -inf
      %913 = vmax.xlane.f32.xlu0 %v912
      %v914 = vpop.xlane.xlu0 %913
      %v915 = vsel %vm902, %v883, -inf
      %916 = vmax.xlane.f32.xlu0 %v915
      %v917 = vpop.xlane.xlu0 %916
      %v918 = vsel %vm902, %v885, -inf
      %919 = vmax.xlane.f32.xlu0 %v918
      %v920 = vpop.xlane.xlu0 %919
      %v921 = vsel %vm902, %v888, -inf
      %922 = vmax.xlane.f32.xlu0 %v921
      %v923 = vpop.xlane.xlu0 %922
      %v924 = vsel %vm902, %v890, -inf
      %925 = vmax.xlane.f32.xlu0 %v924
      %v926 = vpop.xlane.xlu0 %925
      %v927 = vsel %vm902, %v893, -inf
      %928 = vmax.xlane.f32.xlu0 %v927
      %v929 = vpop.xlane.xlu0 %928
      %v930 = vsel %vm902, %v895, -inf
      %931 = vmax.xlane.f32.xlu0 %v930
      %v932 = vpop.xlane.xlu0 %931
      %v933 = vsel %vm902, %v898, -inf
      %934 = vmax.xlane.f32.xlu0 %v933
      %v935 = vpop.xlane.xlu0 %934
      %v936 = vsel %vm902, %v900, -inf
      %937 = vmax.xlane.f32.xlu0 %v936
      %v938 = vpop.xlane.xlu0 %937
      %v939 = vsub.f32 %v873, %v905
      %v940 = vsub.f32 %v875, %v908
      %v941 = vsub.f32 %v878, %v911
      %v942 = vsub.f32 %v880, %v914
      %v943 = vsub.f32 %v883, %v917
      %v944 = vsub.f32 %v885, %v920
      %v945 = vsub.f32 %v888, %v923
      %v946 = vsub.f32 %v890, %v926
      %v947 = vsub.f32 %v893, %v929
      %v948 = vsub.f32 %v895, %v932
      %v949 = vsub.f32 %v898, %v935
      %v950 = vsub.f32 %v900, %v938
      %v951 = vmul.f32 %v939, 1.442695
      %v952 = vpow.pop %v951
      %v953 = vmul.f32 %v940, 1.442695
      %v954 = vpow.pop %v953
      %v955 = vmul.f32 %v941, 1.442695
      %v956 = vpow.pop %v955
      %v957 = vmul.f32 %v942, 1.442695
      %v958 = vpow.pop %v957
      %v959 = vmul.f32 %v943, 1.442695
      %v960 = vpow.pop %v959
      %v961 = vmul.f32 %v944, 1.442695
      %v962 = vpow.pop %v961
      %v963 = vmul.f32 %v945, 1.442695
      %v964 = vpow.pop %v963
      %v965 = vmul.f32 %v946, 1.442695
      %v966 = vpow.pop %v965
      %v967 = vmul.f32 %v947, 1.442695
      %v968 = vpow.pop %v967
      %v969 = vmul.f32 %v948, 1.442695
      %v970 = vpow.pop %v969
      %v971 = vmul.f32 %v949, 1.442695
      %v972 = vpow.pop %v971
      %v973 = vmul.f32 %v950, 1.442695
      %v974 = vpow.pop %v973
      %v975 = vsel %vm902, %v952, 0.0
      %976 = vadd.xlane.f32.xlu0 %v975
      %v977 = vpop.xlane.xlu0 %976
      %v978 = vsel %vm902, %v954, 0.0
      %979 = vadd.xlane.f32.xlu0 %v978
      %v980 = vpop.xlane.xlu0 %979
      %v981 = vsel %vm902, %v956, 0.0
      %982 = vadd.xlane.f32.xlu0 %v981
      %v983 = vpop.xlane.xlu0 %982
      %v984 = vsel %vm902, %v958, 0.0
      %985 = vadd.xlane.f32.xlu0 %v984
      %v986 = vpop.xlane.xlu0 %985
      %v987 = vsel %vm902, %v960, 0.0
      %988 = vadd.xlane.f32.xlu0 %v987
      %v989 = vpop.xlane.xlu0 %988
      %v990 = vsel %vm902, %v962, 0.0
      %991 = vadd.xlane.f32.xlu0 %v990
      %v992 = vpop.xlane.xlu0 %991
      %v993 = vsel %vm902, %v964, 0.0
      %994 = vadd.xlane.f32.xlu0 %v993
      %v995 = vpop.xlane.xlu0 %994
      %v996 = vsel %vm902, %v966, 0.0
      %997 = vadd.xlane.f32.xlu0 %v996
      %v998 = vpop.xlane.xlu0 %997
      %v999 = vsel %vm902, %v968, 0.0
      %1000 = vadd.xlane.f32.xlu0 %v999
      %v1001 = vpop.xlane.xlu0 %1000
      %v1002 = vsel %vm902, %v970, 0.0
      %1003 = vadd.xlane.f32.xlu0 %v1002
      %v1004 = vpop.xlane.xlu0 %1003
      %v1005 = vsel %vm902, %v972, 0.0
      %1006 = vadd.xlane.f32.xlu0 %v1005
      %v1007 = vpop.xlane.xlu0 %1006
      %v1008 = vsel %vm902, %v974, 0.0
      %1009 = vadd.xlane.f32.xlu0 %v1008
      %v1010 = vpop.xlane.xlu0 %1009
      %v1011 = vrcp.pop %v977
      %v1012 = vrcp.pop %v980
      %v1013 = vrcp.pop %v983
      %v1014 = vrcp.pop %v986
      %v1015 = vrcp.pop %v989
      %v1016 = vrcp.pop %v992
      %v1017 = vrcp.pop %v995
      %v1018 = vrcp.pop %v998
      %v1019 = vrcp.pop %v1001
      %v1020 = vrcp.pop %v1004
      %v1021 = vrcp.pop %v1007
      %v1022 = vrcp.pop %v1010
      %v1023 = vmul.f32 %v952, %v1011
      %v1024 = vmul.f32 %v954, %v1012
      %v1025 = vmul.f32 %v956, %v1013
      %v1026 = vmul.f32 %v958, %v1014
      %v1027 = vmul.f32 %v960, %v1015
      %v1028 = vmul.f32 %v962, %v1016
      %v1029 = vmul.f32 %v964, %v1017
      %v1030 = vmul.f32 %v966, %v1018
      %v1031 = vmul.f32 %v968, %v1019
      %v1032 = vmul.f32 %v970, %v1020
      %v1033 = vmul.f32 %v972, %v1021
      %v1034 = vmul.f32 %v974, %v1022
      %v1035 = vpack.c.bf16 %v1024, %v1023
      %v1036 = vpack.c.bf16 %v1026, %v1025
      %v1037 = vpack.c.bf16 %v1028, %v1027
      %v1038 = vpack.c.bf16 %v1030, %v1029
      %v1039 = vpack.c.bf16 %v1032, %v1031
      %v1040 = vpack.c.bf16 %v1034, %v1033
      %1043 = vrot.lane.b32.xlu0 %v798, 64
      %v1044 = vpop.permute.xlu0 %1043
      %1045 = vrot.lane.b32.xlu0 %v799, 64
      %v1046 = vpop.permute.xlu0 %1045
      %v1049 = vsel %vm902, %v1035, 0
      %v1052 = vsel %vm902, %v1036, 0
      %v1055 = vsel %vm902, %v1037, 0
      %v1058 = vsel %vm902, %v1038, 0
      %v1061 = vsel %vm902, %v1039, 0
      %v1064 = vsel %vm902, %v1040, 0
      %vm1066 = vcmask 1043456
      %v1068 = vsel %vm1066, %v1046, 0
      %1070 = vmatpush.bf16.msra.mxu0 0
      %1071 = vmatpush.bf16.msra.mxu0 0
      %1072 = vmatpush.bf16.msra.mxu0 0
      %1073 = vmatpush.bf16.msra.mxu0 0
      %1074 = vmatpush.bf16.msra.mxu0 0
      %1075 = vmatpush.bf16.msra.mxu0 0
      %1076 = vmatpush.bf16.msra.mxu0 %v1068
      %1077 = vmatpush.bf16.msra.mxu0 %v1044
      %1078 = vmatmul.bf16.gmra.mxu0 %v1049
      %v1079 = vpop.f32.mrf.mxu0
      %v1080 = vadd.f32 0.0, %v1079
      %v1081 = vpop.f32.mrf.mxu0
      %v1082 = vadd.f32 0.0, %v1081
      %1083 = vmatmul.bf16.gmra.mxu0 %v1052
      %v1084 = vpop.f32.mrf.mxu0
      %v1085 = vadd.f32 0.0, %v1084
      %v1086 = vpop.f32.mrf.mxu0
      %v1087 = vadd.f32 0.0, %v1086
      %1088 = vmatmul.bf16.gmra.mxu0 %v1055
      %v1089 = vpop.f32.mrf.mxu0
      %v1090 = vadd.f32 0.0, %v1089
      %v1091 = vpop.f32.mrf.mxu0
      %v1092 = vadd.f32 0.0, %v1091
      %1093 = vmatmul.bf16.gmra.mxu0 %v1058
      %v1094 = vpop.f32.mrf.mxu0
      %v1095 = vadd.f32 0.0, %v1094
      %v1096 = vpop.f32.mrf.mxu0
      %v1097 = vadd.f32 0.0, %v1096
      %1098 = vmatmul.bf16.gmra.mxu0 %v1061
      %v1099 = vpop.f32.mrf.mxu0
      %v1100 = vadd.f32 0.0, %v1099
      %v1101 = vpop.f32.mrf.mxu0
      %v1102 = vadd.f32 0.0, %v1101
      %1103 = vmatmul.bf16.gmra.mxu0 %v1064
      %v1104 = vpop.f32.mrf.mxu0
      %v1105 = vadd.f32 0.0, %v1104
      %v1106 = vpop.f32.mrf.mxu0
      %v1107 = vadd.f32 0.0, %v1106
      %1108 = vdwg.mxu0
      %v1109 = vmul.f32 %v1080, %v804
      %v1110 = vmul.f32 %v1082, %v804
      %v1111 = vmul.f32 %v1085, %v804
      %v1112 = vmul.f32 %v1087, %v805
      %v1113 = vmul.f32 %v1090, %v805
      %v1114 = vmul.f32 %v1092, %v805
      %v1115 = vmul.f32 %v1095, %v806
      %v1116 = vmul.f32 %v1097, %v806
      %v1117 = vmul.f32 %v1100, %v806
      %v1118 = vmul.f32 %v1102, %v807
      %v1119 = vmul.f32 %v1105, %v807
      %v1120 = vmul.f32 %v1107, %v807
      %v1121 = vsel %vm590, %v1109, 0.0
      %v1122 = vsel %vm590, %v1112, 0.0
      %v1123 = vadd.f32 %v1121, %v1122
      %v1124 = vsel %vm590, %v1115, 0.0
      %v1125 = vadd.f32 %v1123, %v1124
      %v1126 = vsel %vm590, %v1118, 0.0
      %v1127 = vadd.f32 %v1125, %v1126
      %v1128 = vsel %vm590, %v1110, 0.0
      %v1129 = vsel %vm590, %v1113, 0.0
      %v1130 = vadd.f32 %v1128, %v1129
      %v1131 = vsel %vm590, %v1116, 0.0
      %v1132 = vadd.f32 %v1130, %v1131
      %v1133 = vsel %vm590, %v1119, 0.0
      %v1134 = vadd.f32 %v1132, %v1133
      %v1135 = vsel %vm590, %v1111, 0.0
      %v1136 = vsel %vm590, %v1114, 0.0
      %v1137 = vadd.f32 %v1135, %v1136
      %v1138 = vsel %vm590, %v1117, 0.0
      %v1139 = vadd.f32 %v1137, %v1138
      %v1140 = vsel %vm590, %v1120, 0.0
      %v1141 = vadd.f32 %v1139, %v1140
      %v1142 = vpack.c.bf16 %v1134, %v1127
      %v1143 = vpack.c.bf16 %v1141, %v1141
      %v1144 = vld [vmem:[%s9] sm:$0xf]
      %v1145 = vld [vmem:[%s9 + $0x4] sm:$0xf]
      %v1146 = vld [vmem:[%s9 + $0x8] sm:$0xf]
      %v1147 = vld [vmem:[%s9 + $0xc] sm:$0xf]
      %v1148 = vld [vmem:[%s10] sm:$0x1]
      %v1150 = vperm.slane %v1148, 0
      %v1156 = vunpack.c.l.b16 %v1144
      %v1157 = vunpack.c.l.b16 %v1145
      %v1158 = vunpack.c.l.b16 %v1146
      %v1159 = vunpack.c.l.b16 %v1147
      %v1160 = vpack.c.b16 %v1157, %v1156
      %v1161 = vpack.c.b16 %v1159, %v1158
      %v1165 = vsel %vm590, %v1142, 0
      %v1168 = vsel %vm590, %v1143, 0
      %1170 = vmatpush.bf16.msra.mxu0 0
      %1171 = vmatpush.bf16.msra.mxu0 0
      %1172 = vmatpush.bf16.msra.mxu0 0
      %1173 = vmatpush.bf16.msra.mxu0 0
      %1174 = vmatpush.bf16.msra.mxu0 0
      %1175 = vmatpush.bf16.msra.mxu0 0
      %1176 = vmatpush.bf16.msra.mxu0 %v1161
      %1177 = vmatpush.bf16.msra.mxu0 %v1160
      %1178 = vmatmul.bf16.gmra.mxu0 %v1165
      %v1179 = vpop.f32.mrf.mxu0
      %v1180 = vadd.f32 %v1150, %v1179
      %v1181 = vpop.f32.mrf.mxu0
      %v1182 = vadd.f32 %v1150, %v1181
      %1183 = vmatmul.bf16.gmra.mxu0 %v1168
      %v1184 = vpop.f32.mrf.mxu0
      %v1185 = vadd.f32 %v1150, %v1184
      %v1186 = vpop.f32.mrf.mxu0
      %1187 = vdwg.mxu0
      %v1188 = vadd.f32 %v669, %v1180
      %v1189 = vadd.f32 %v670, %v1182
      %v1190 = vadd.f32 %v671, %v1185
      %v1191 = vsel %vm590, %v1188, 0.0
      %1192 = vadd.xlane.f32.xlu0 %v1191
      %v1193 = vpop.xlane.xlu0 %1192
      %v1194 = vsel %vm590, %v1189, 0.0
      %1195 = vadd.xlane.f32.xlu0 %v1194
      %v1196 = vpop.xlane.xlu0 %1195
      %v1197 = vsel %vm590, %v1190, 0.0
      %1198 = vadd.xlane.f32.xlu0 %v1197
      %v1199 = vpop.xlane.xlu0 %1198
      %v1200 = vmul.f32 %v1193, %v606
      %v1201 = vmul.f32 %v1196, %v606
      %v1202 = vmul.f32 %v1199, %v606
      %v1203 = vsub.f32 %v1188, %v1200
      %v1204 = vsub.f32 %v1189, %v1201
      %v1205 = vsub.f32 %v1190, %v1202
      %v1206 = vmul.f32 %v1203, %v1203
      %v1207 = vmul.f32 %v1204, %v1204
      %v1208 = vmul.f32 %v1205, %v1205
      %v1209 = vsel %vm590, %v1206, 0.0
      %1210 = vadd.xlane.f32.xlu0 %v1209
      %v1211 = vpop.xlane.xlu0 %1210
      %v1212 = vsel %vm590, %v1207, 0.0
      %1213 = vadd.xlane.f32.xlu0 %v1212
      %v1214 = vpop.xlane.xlu0 %1213
      %v1215 = vsel %vm590, %v1208, 0.0
      %1216 = vadd.xlane.f32.xlu0 %v1215
      %v1217 = vpop.xlane.xlu0 %1216
      %v1218 = vmul.f32 %v1211, %v606
      %v1219 = vmul.f32 %v1214, %v606
      %v1220 = vmul.f32 %v1217, %v606
      %v1221 = vadd.f32 %v1218, 1e-05
      %v1222 = vadd.f32 %v1219, 1e-05
      %v1223 = vadd.f32 %v1220, 1e-05
      %v1224 = vrsqrt.pop %v1221
      %v1225 = vmul.f32 %v1224, %v1221
      %v1226 = vmul.f32 %v1225, %v1224
      %v1227 = vmul.f32 0.5, %v1226
      %v1228 = vsub.f32 1.5, %v1227
      %v1229 = vmul.f32 %v1224, %v1228
      %vm1230 = vweird.f32 %v1221
      %vm1231 = vweird.f32 %v1224
      %vm1232 = vmor %vm1230, %vm1231
      %v1233 = vsel %vm1232, %v1224, %v1229
      %v1234 = vrsqrt.pop %v1222
      %v1235 = vmul.f32 %v1234, %v1222
      %v1236 = vmul.f32 %v1235, %v1234
      %v1237 = vmul.f32 0.5, %v1236
      %v1238 = vsub.f32 1.5, %v1237
      %v1239 = vmul.f32 %v1234, %v1238
      %vm1240 = vweird.f32 %v1222
      %vm1241 = vweird.f32 %v1234
      %vm1242 = vmor %vm1240, %vm1241
      %v1243 = vsel %vm1242, %v1234, %v1239
      %v1244 = vrsqrt.pop %v1223
      %v1245 = vmul.f32 %v1244, %v1223
      %v1246 = vmul.f32 %v1245, %v1244
      %v1247 = vmul.f32 0.5, %v1246
      %v1248 = vsub.f32 1.5, %v1247
      %v1249 = vmul.f32 %v1244, %v1248
      %vm1250 = vweird.f32 %v1223
      %vm1251 = vweird.f32 %v1244
      %vm1252 = vmor %vm1250, %vm1251
      %v1253 = vsel %vm1252, %v1244, %v1249
      %v1254 = vmul.f32 %v1203, %v1233
      %v1255 = vmul.f32 %v1204, %v1243
      %v1256 = vmul.f32 %v1205, %v1253
      %v1257 = vperm.slane %v672, 2
      %v1258 = vmul.f32 %v1254, %v1257
      %v1259 = vmul.f32 %v1255, %v1257
      %v1260 = vmul.f32 %v1256, %v1257
      %v1261 = vperm.slane %v672, 3
      %v1262 = vadd.f32 %v1258, %v1261
      %v1263 = vadd.f32 %v1259, %v1261
      %v1264 = vadd.f32 %v1260, %v1261
      %v1265 = vpack.c.bf16 %v1263, %v1262
      %v1266 = vpack.c.bf16 %v1264, %v1264
      %v1267 = vld [vmem:[%s11] sm:$0xf]
      %v1268 = vld [vmem:[%s11 + $0x4] sm:$0xf]
      %v1269 = vld [vmem:[%s11 + $0x8] sm:$0xf]
      %v1270 = vld [vmem:[%s11 + $0xc] sm:$0xf]
      %v1271 = vld [vmem:[%s12] sm:$0x1]
      %v1273 = vperm.slane %v1271, 0
      %v1279 = vunpack.c.l.b16 %v1267
      %v1280 = vunpack.c.l.b16 %v1268
      %v1281 = vunpack.c.l.b16 %v1269
      %v1282 = vunpack.c.l.b16 %v1270
      %v1283 = vpack.c.b16 %v1280, %v1279
      %v1284 = vpack.c.b16 %v1282, %v1281
      %v1288 = vsel %vm590, %v1265, 0
      %v1291 = vsel %vm590, %v1266, 0
      %1293 = vmatpush.bf16.msra.mxu0 0
      %1294 = vmatpush.bf16.msra.mxu0 0
      %1295 = vmatpush.bf16.msra.mxu0 0
      %1296 = vmatpush.bf16.msra.mxu0 0
      %1297 = vmatpush.bf16.msra.mxu0 0
      %1298 = vmatpush.bf16.msra.mxu0 0
      %1299 = vmatpush.bf16.msra.mxu0 %v1284
      %1300 = vmatpush.bf16.msra.mxu0 %v1283
      %1301 = vmatmul.bf16.gmra.mxu0 %v1288
      %v1302 = vpop.f32.mrf.mxu0
      %v1303 = vadd.f32 %v1273, %v1302
      %v1304 = vpop.f32.mrf.mxu0
      %v1305 = vadd.f32 %v1273, %v1304
      %1306 = vmatmul.bf16.gmra.mxu0 %v1291
      %v1307 = vpop.f32.mrf.mxu0
      %v1308 = vadd.f32 %v1273, %v1307
      %v1309 = vpop.f32.mrf.mxu0
      %1310 = vdwg.mxu0
      %v1311 = vmul.f32 %v1303, 0.5
      %v1312 = vmul.f32 %v1305, 0.5
      %v1313 = vmul.f32 %v1308, 0.5
      %v1314 = vmul.f32 %v1303, 0.044715
      %v1315 = vmul.f32 %v1305, 0.044715
      %v1316 = vmul.f32 %v1308, 0.044715
      %v1317 = vmul.f32 %v1314, %v1303
      %v1318 = vmul.f32 %v1315, %v1305
      %v1319 = vmul.f32 %v1316, %v1308
      %v1320 = vmul.f32 %v1317, %v1303
      %v1321 = vmul.f32 %v1318, %v1305
      %v1322 = vmul.f32 %v1319, %v1308
      %v1323 = vadd.f32 %v1303, %v1320
      %v1324 = vadd.f32 %v1305, %v1321
      %v1325 = vadd.f32 %v1308, %v1322
      %v1326 = vmul.f32 %v1323, 0.7978846
      %v1327 = vmul.f32 %v1324, 0.7978846
      %v1328 = vmul.f32 %v1325, 0.7978846
      %v1329 = vtanh.pop %v1326
      %v1330 = vtanh.pop %v1327
      %v1331 = vtanh.pop %v1328
      %v1332 = vadd.f32 %v1329, 1.0
      %v1333 = vadd.f32 %v1330, 1.0
      %v1334 = vadd.f32 %v1331, 1.0
      %v1335 = vmul.f32 %v1311, %v1332
      %v1336 = vmul.f32 %v1312, %v1333
      %v1337 = vmul.f32 %v1313, %v1334
      %v1338 = vpack.c.bf16 %v1336, %v1335
      %v1339 = vpack.c.bf16 %v1337, %v1337
      %v1340 = vld [vmem:[%s13] sm:$0xf]
      %v1341 = vld [vmem:[%s13 + $0x4] sm:$0xf]
      %v1342 = vld [vmem:[%s13 + $0x8] sm:$0xf]
      %v1343 = vld [vmem:[%s13 + $0xc] sm:$0xf]
      %v1344 = vld [vmem:[%s13 + $0x10] sm:$0xf]
      %v1345 = vld [vmem:[%s13 + $0x14] sm:$0xf]
      %v1346 = vld [vmem:[%s13 + $0x18] sm:$0xf]
      %v1347 = vld [vmem:[%s13 + $0x1c] sm:$0xf]
      %v1348 = vld [vmem:[%s13 + $0x20] sm:$0xf]
      %v1349 = vld [vmem:[%s13 + $0x24] sm:$0xf]
      %v1350 = vld [vmem:[%s13 + $0x28] sm:$0xf]
      %v1351 = vld [vmem:[%s13 + $0x2c] sm:$0xf]
      %v1352 = vld [vmem:[%s13 + $0x30] sm:$0xf]
      %v1353 = vld [vmem:[%s13 + $0x34] sm:$0xf]
      %v1354 = vld [vmem:[%s13 + $0x38] sm:$0xf]
      %v1355 = vld [vmem:[%s13 + $0x3c] sm:$0xf]
      %v1356 = vld [vmem:[%s14] sm:$0x1]
      %v1358 = vperm.slane %v1356, 0
      %v1376 = vunpack.c.l.b16 %v1340
      %v1377 = vunpack.c.l.b16 %v1341
      %v1378 = vunpack.c.l.b16 %v1342
      %v1379 = vunpack.c.l.b16 %v1343
      %v1380 = vunpack.c.l.b16 %v1344
      %v1381 = vunpack.c.l.b16 %v1345
      %v1382 = vunpack.c.l.b16 %v1346
      %v1383 = vunpack.c.l.b16 %v1347
      %v1384 = vunpack.c.l.b16 %v1348
      %v1385 = vunpack.c.l.b16 %v1349
      %v1386 = vunpack.c.l.b16 %v1350
      %v1387 = vunpack.c.l.b16 %v1351
      %v1388 = vunpack.c.l.b16 %v1352
      %v1389 = vunpack.c.l.b16 %v1353
      %v1390 = vunpack.c.l.b16 %v1354
      %v1391 = vunpack.c.l.b16 %v1355
      %v1392 = vpack.c.b16 %v1377, %v1376
      %v1393 = vpack.c.b16 %v1379, %v1378
      %v1394 = vpack.c.b16 %v1381, %v1380
      %v1395 = vpack.c.b16 %v1383, %v1382
      %v1396 = vpack.c.b16 %v1385, %v1384
      %v1397 = vpack.c.b16 %v1387, %v1386
      %v1398 = vpack.c.b16 %v1389, %v1388
      %v1399 = vpack.c.b16 %v1391, %v1390
      %1408 = vmatpush.bf16.msra.mxu0 %v1399
      %1409 = vmatpush.bf16.msra.mxu0 %v1398
      %1410 = vmatpush.bf16.msra.mxu0 %v1397
      %1411 = vmatpush.bf16.msra.mxu0 %v1396
      %1412 = vmatpush.bf16.msra.mxu0 %v1395
      %1413 = vmatpush.bf16.msra.mxu0 %v1394
      %1414 = vmatpush.bf16.msra.mxu0 %v1393
      %1415 = vmatpush.bf16.msra.mxu0 %v1392
      %1416 = vmatmul.bf16.gmra.mxu0 %v1338
      %v1417 = vpop.f32.mrf.mxu0
      %v1418 = vadd.f32 %v1358, %v1417
      %v1419 = vpop.f32.mrf.mxu0
      %v1420 = vadd.f32 %v1358, %v1419
      %1421 = vmatmul.bf16.gmra.mxu0 %v1339
      %v1422 = vpop.f32.mrf.mxu0
      %v1423 = vadd.f32 %v1358, %v1422
      %v1424 = vpop.f32.mrf.mxu0
      %1425 = vdwg.mxu0
      %v1426 = vadd.f32 %v1188, %v1418
      %v1427 = vadd.f32 %v1189, %v1420
      %v1428 = vadd.f32 %v1190, %v1423
      %s1429 = scalar_lea.vmem %s6, 4
      %v1430 = vld [vmem:[%s1429] sm:$0xf]
      %v1431 = vsel %vm590, %v1426, 0.0
      %1432 = vadd.xlane.f32.xlu0 %v1431
      %v1433 = vpop.xlane.xlu0 %1432
      %v1434 = vsel %vm590, %v1427, 0.0
      %1435 = vadd.xlane.f32.xlu0 %v1434
      %v1436 = vpop.xlane.xlu0 %1435
      %v1437 = vsel %vm590, %v1428, 0.0
      %1438 = vadd.xlane.f32.xlu0 %v1437
      %v1439 = vpop.xlane.xlu0 %1438
      %v1440 = vmul.f32 %v1433, %v606
      %v1441 = vmul.f32 %v1436, %v606
      %v1442 = vmul.f32 %v1439, %v606
      %v1443 = vsub.f32 %v1426, %v1440
      %v1444 = vsub.f32 %v1427, %v1441
      %v1445 = vsub.f32 %v1428, %v1442
      %v1446 = vmul.f32 %v1443, %v1443
      %v1447 = vmul.f32 %v1444, %v1444
      %v1448 = vmul.f32 %v1445, %v1445
      %v1449 = vsel %vm590, %v1446, 0.0
      %1450 = vadd.xlane.f32.xlu0 %v1449
      %v1451 = vpop.xlane.xlu0 %1450
      %v1452 = vsel %vm590, %v1447, 0.0
      %1453 = vadd.xlane.f32.xlu0 %v1452
      %v1454 = vpop.xlane.xlu0 %1453
      %v1455 = vsel %vm590, %v1448, 0.0
      %1456 = vadd.xlane.f32.xlu0 %v1455
      %v1457 = vpop.xlane.xlu0 %1456
      %v1458 = vmul.f32 %v1451, %v606
      %v1459 = vmul.f32 %v1454, %v606
      %v1460 = vmul.f32 %v1457, %v606
      %v1461 = vadd.f32 %v1458, 1e-05
      %v1462 = vadd.f32 %v1459, 1e-05
      %v1463 = vadd.f32 %v1460, 1e-05
      %v1464 = vrsqrt.pop %v1461
      %v1465 = vmul.f32 %v1464, %v1461
      %v1466 = vmul.f32 %v1465, %v1464
      %v1467 = vmul.f32 0.5, %v1466
      %v1468 = vsub.f32 1.5, %v1467
      %v1469 = vmul.f32 %v1464, %v1468
      %vm1470 = vweird.f32 %v1461
      %vm1471 = vweird.f32 %v1464
      %vm1472 = vmor %vm1470, %vm1471
      %v1473 = vsel %vm1472, %v1464, %v1469
      %v1474 = vrsqrt.pop %v1462
      %v1475 = vmul.f32 %v1474, %v1462
      %v1476 = vmul.f32 %v1475, %v1474
      %v1477 = vmul.f32 0.5, %v1476
      %v1478 = vsub.f32 1.5, %v1477
      %v1479 = vmul.f32 %v1474, %v1478
      %vm1480 = vweird.f32 %v1462
      %vm1481 = vweird.f32 %v1474
      %vm1482 = vmor %vm1480, %vm1481
      %v1483 = vsel %vm1482, %v1474, %v1479
      %v1484 = vrsqrt.pop %v1463
      %v1485 = vmul.f32 %v1484, %v1463
      %v1486 = vmul.f32 %v1485, %v1484
      %v1487 = vmul.f32 0.5, %v1486
      %v1488 = vsub.f32 1.5, %v1487
      %v1489 = vmul.f32 %v1484, %v1488
      %vm1490 = vweird.f32 %v1463
      %vm1491 = vweird.f32 %v1484
      %vm1492 = vmor %vm1490, %vm1491
      %v1493 = vsel %vm1492, %v1484, %v1489
      %v1494 = vmul.f32 %v1443, %v1473
      %v1495 = vmul.f32 %v1444, %v1483
      %v1496 = vmul.f32 %v1445, %v1493
      %v1497 = vperm.slane %v1430, 0
      %v1498 = vmul.f32 %v1494, %v1497
      %v1499 = vmul.f32 %v1495, %v1497
      %v1500 = vmul.f32 %v1496, %v1497
      %v1501 = vperm.slane %v1430, 1
      %v1502 = vadd.f32 %v1498, %v1501
      %v1503 = vadd.f32 %v1499, %v1501
      %v1504 = vadd.f32 %v1500, %v1501
      %v1505 = vpack.c.bf16 %v1503, %v1502
      %v1506 = vpack.c.bf16 %v1504, %v1504
      %s1507 = scalar_lea.vmem %s7, 16
      %v1508 = vld [vmem:[%s1507] sm:$0xf]
      %v1509 = vld [vmem:[%s1507 + $0x4] sm:$0xf]
      %v1510 = vld [vmem:[%s1507 + $0x8] sm:$0xf]
      %v1511 = vld [vmem:[%s1507 + $0xc] sm:$0xf]
      %s1512 = scalar_lea.vmem %s8, 1
      %v1513 = vld [vmem:[%s1512] sm:$0x1]
      %v1515 = vperm.slane %v1513, 0
      %v1521 = vunpack.c.l.b16 %v1508
      %v1522 = vunpack.c.l.b16 %v1509
      %v1523 = vunpack.c.l.b16 %v1510
      %v1524 = vunpack.c.l.b16 %v1511
      %v1525 = vpack.c.b16 %v1522, %v1521
      %v1526 = vpack.c.b16 %v1524, %v1523
      %v1530 = vsel %vm590, %v1505, 0
      %v1533 = vsel %vm590, %v1506, 0
      %1535 = vmatpush.bf16.msra.mxu0 0
      %1536 = vmatpush.bf16.msra.mxu0 0
      %1537 = vmatpush.bf16.msra.mxu0 0
      %1538 = vmatpush.bf16.msra.mxu0 0
      %1539 = vmatpush.bf16.msra.mxu0 0
      %1540 = vmatpush.bf16.msra.mxu0 0
      %1541 = vmatpush.bf16.msra.mxu0 %v1526
      %1542 = vmatpush.bf16.msra.mxu0 %v1525
      %1543 = vmatmul.bf16.gmra.mxu0 %v1530
      %v1544 = vpop.f32.mrf.mxu0
      %v1545 = vadd.f32 %v1515, %v1544
      %v1546 = vpop.f32.mrf.mxu0
      %v1547 = vadd.f32 %v1515, %v1546
      %1548 = vmatmul.bf16.gmra.mxu0 %v1533
      %v1549 = vpop.f32.mrf.mxu0
      %v1550 = vadd.f32 %v1515, %v1549
      %v1551 = vpop.f32.mrf.mxu0
      %1552 = vdwg.mxu0
      %v1553 = vmul.f32 %v1545, 0.35355338
      %v1554 = vmul.f32 %v1547, 0.35355338
      %v1555 = vmul.f32 %v1550, 0.35355338
      %v1556 = vpack.c.bf16 %v1554, %v1553
      %v1557 = vpack.c.bf16 %v1555, %v1555
      %v1558 = vpack.c.bf16 %v1547, %v1545
      %v1559 = vpack.c.bf16 %v1550, %v1550
      %v1560 = vmul.f32 %v1545, %v804
      %v1561 = vmul.f32 %v1547, %v804
      %v1562 = vmul.f32 %v1550, %v804
      %v1563 = vmul.f32 %v1545, %v805
      %v1564 = vmul.f32 %v1547, %v805
      %v1565 = vmul.f32 %v1550, %v805
      %v1566 = vmul.f32 %v1545, %v806
      %v1567 = vmul.f32 %v1547, %v806
      %v1568 = vmul.f32 %v1550, %v806
      %v1569 = vmul.f32 %v1545, %v807
      %v1570 = vmul.f32 %v1547, %v807
      %v1571 = vmul.f32 %v1550, %v807
      %v1572 = vpack.c.bf16 %v1561, %v1560
      %v1573 = vpack.c.bf16 %v1563, %v1562
      %v1574 = vpack.c.bf16 %v1565, %v1564
      %v1575 = vpack.c.bf16 %v1567, %v1566
      %v1576 = vpack.c.bf16 %v1569, %v1568
      %v1577 = vpack.c.bf16 %v1571, %v1570
      %1580 = vrot.lane.b32.xlu0 %v1556, 96
      %v1581 = vpop.permute.xlu0 %1580
      %1582 = vrot.lane.b32.xlu0 %v1557, 96
      %v1583 = vpop.permute.xlu0 %1582
      %v1585 = vsel %vm590, %v1572, 0
      %v1588 = vsel %vm590, %v1573, 0
      %v1591 = vsel %vm590, %v1574, 0
      %v1594 = vsel %vm590, %v1575, 0
      %v1597 = vsel %vm590, %v1576, 0
      %v1600 = vsel %vm590, %v1577, 0
      %v1603 = vsel %vm590, %v1581, 0
      %v1606 = vsel %vm590, %v1583, 0
      %1608 = vmatpush.bf16.xpose.msra.mxu0 0
      %1609 = vmatpush.bf16.xpose.msra.mxu0 0
      %1610 = vmatpush.bf16.xpose.msra.mxu0 0
      %1611 = vmatpush.bf16.xpose.msra.mxu0 0
      %1612 = vmatpush.bf16.xpose.msra.mxu0 0
      %1613 = vmatpush.bf16.xpose.msra.mxu0 0
      %1614 = vmatpush.bf16.xpose.msra.mxu0 %v1606
      %1615 = vmatpush.bf16.xpose.msra.mxu0 %v1603
      %1616 = vmatmul.bf16.gmra.mxu0 %v1585
      %v1617 = vpop.f32.mrf.mxu0
      %v1618 = vadd.f32 %v831, %v1617
      %v1619 = vpop.f32.mrf.mxu0
      %v1620 = vadd.f32 %v831, %v1619
      %1621 = vmatmul.bf16.gmra.mxu0 %v1588
      %v1622 = vpop.f32.mrf.mxu0
      %v1623 = vadd.f32 %v831, %v1622
      %v1624 = vpop.f32.mrf.mxu0
      %v1625 = vadd.f32 %v831, %v1624
      %1626 = vmatmul.bf16.gmra.mxu0 %v1591
      %v1627 = vpop.f32.mrf.mxu0
      %v1628 = vadd.f32 %v831, %v1627
      %v1629 = vpop.f32.mrf.mxu0
      %v1630 = vadd.f32 %v831, %v1629
      %1631 = vmatmul.bf16.gmra.mxu0 %v1594
      %v1632 = vpop.f32.mrf.mxu0
      %v1633 = vadd.f32 %v831, %v1632
      %v1634 = vpop.f32.mrf.mxu0
      %v1635 = vadd.f32 %v831, %v1634
      %1636 = vmatmul.bf16.gmra.mxu0 %v1597
      %v1637 = vpop.f32.mrf.mxu0
      %v1638 = vadd.f32 %v831, %v1637
      %v1639 = vpop.f32.mrf.mxu0
      %v1640 = vadd.f32 %v831, %v1639
      %1641 = vmatmul.bf16.gmra.mxu0 %v1600
      %v1642 = vpop.f32.mrf.mxu0
      %v1643 = vadd.f32 %v831, %v1642
      %v1644 = vpop.f32.mrf.mxu0
      %v1645 = vadd.f32 %v831, %v1644
      %1646 = vdwg.mxu0
      %v1647 = vsel %vm902, %v1618, -inf
      %1648 = vmax.xlane.f32.xlu0 %v1647
      %v1649 = vpop.xlane.xlu0 %1648
      %v1650 = vsel %vm902, %v1620, -inf
      %1651 = vmax.xlane.f32.xlu0 %v1650
      %v1652 = vpop.xlane.xlu0 %1651
      %v1653 = vsel %vm902, %v1623, -inf
      %1654 = vmax.xlane.f32.xlu0 %v1653
      %v1655 = vpop.xlane.xlu0 %1654
      %v1656 = vsel %vm902, %v1625, -inf
      %1657 = vmax.xlane.f32.xlu0 %v1656
      %v1658 = vpop.xlane.xlu0 %1657
      %v1659 = vsel %vm902, %v1628, -inf
      %1660 = vmax.xlane.f32.xlu0 %v1659
      %v1661 = vpop.xlane.xlu0 %1660
      %v1662 = vsel %vm902, %v1630, -inf
      %1663 = vmax.xlane.f32.xlu0 %v1662
      %v1664 = vpop.xlane.xlu0 %1663
      %v1665 = vsel %vm902, %v1633, -inf
      %1666 = vmax.xlane.f32.xlu0 %v1665
      %v1667 = vpop.xlane.xlu0 %1666
      %v1668 = vsel %vm902, %v1635, -inf
      %1669 = vmax.xlane.f32.xlu0 %v1668
      %v1670 = vpop.xlane.xlu0 %1669
      %v1671 = vsel %vm902, %v1638, -inf
      %1672 = vmax.xlane.f32.xlu0 %v1671
      %v1673 = vpop.xlane.xlu0 %1672
      %v1674 = vsel %vm902, %v1640, -inf
      %1675 = vmax.xlane.f32.xlu0 %v1674
      %v1676 = vpop.xlane.xlu0 %1675
      %v1677 = vsel %vm902, %v1643, -inf
      %1678 = vmax.xlane.f32.xlu0 %v1677
      %v1679 = vpop.xlane.xlu0 %1678
      %v1680 = vsel %vm902, %v1645, -inf
      %1681 = vmax.xlane.f32.xlu0 %v1680
      %v1682 = vpop.xlane.xlu0 %1681
      %v1683 = vsub.f32 %v1618, %v1649
      %v1684 = vsub.f32 %v1620, %v1652
      %v1685 = vsub.f32 %v1623, %v1655
      %v1686 = vsub.f32 %v1625, %v1658
      %v1687 = vsub.f32 %v1628, %v1661
      %v1688 = vsub.f32 %v1630, %v1664
      %v1689 = vsub.f32 %v1633, %v1667
      %v1690 = vsub.f32 %v1635, %v1670
      %v1691 = vsub.f32 %v1638, %v1673
      %v1692 = vsub.f32 %v1640, %v1676
      %v1693 = vsub.f32 %v1643, %v1679
      %v1694 = vsub.f32 %v1645, %v1682
      %v1695 = vmul.f32 %v1683, 1.442695
      %v1696 = vpow.pop %v1695
      %v1697 = vmul.f32 %v1684, 1.442695
      %v1698 = vpow.pop %v1697
      %v1699 = vmul.f32 %v1685, 1.442695
      %v1700 = vpow.pop %v1699
      %v1701 = vmul.f32 %v1686, 1.442695
      %v1702 = vpow.pop %v1701
      %v1703 = vmul.f32 %v1687, 1.442695
      %v1704 = vpow.pop %v1703
      %v1705 = vmul.f32 %v1688, 1.442695
      %v1706 = vpow.pop %v1705
      %v1707 = vmul.f32 %v1689, 1.442695
      %v1708 = vpow.pop %v1707
      %v1709 = vmul.f32 %v1690, 1.442695
      %v1710 = vpow.pop %v1709
      %v1711 = vmul.f32 %v1691, 1.442695
      %v1712 = vpow.pop %v1711
      %v1713 = vmul.f32 %v1692, 1.442695
      %v1714 = vpow.pop %v1713
      %v1715 = vmul.f32 %v1693, 1.442695
      %v1716 = vpow.pop %v1715
      %v1717 = vmul.f32 %v1694, 1.442695
      %v1718 = vpow.pop %v1717
      %v1719 = vsel %vm902, %v1696, 0.0
      %1720 = vadd.xlane.f32.xlu0 %v1719
      %v1721 = vpop.xlane.xlu0 %1720
      %v1722 = vsel %vm902, %v1698, 0.0
      %1723 = vadd.xlane.f32.xlu0 %v1722
      %v1724 = vpop.xlane.xlu0 %1723
      %v1725 = vsel %vm902, %v1700, 0.0
      %1726 = vadd.xlane.f32.xlu0 %v1725
      %v1727 = vpop.xlane.xlu0 %1726
      %v1728 = vsel %vm902, %v1702, 0.0
      %1729 = vadd.xlane.f32.xlu0 %v1728
      %v1730 = vpop.xlane.xlu0 %1729
      %v1731 = vsel %vm902, %v1704, 0.0
      %1732 = vadd.xlane.f32.xlu0 %v1731
      %v1733 = vpop.xlane.xlu0 %1732
      %v1734 = vsel %vm902, %v1706, 0.0
      %1735 = vadd.xlane.f32.xlu0 %v1734
      %v1736 = vpop.xlane.xlu0 %1735
      %v1737 = vsel %vm902, %v1708, 0.0
      %1738 = vadd.xlane.f32.xlu0 %v1737
      %v1739 = vpop.xlane.xlu0 %1738
      %v1740 = vsel %vm902, %v1710, 0.0
      %1741 = vadd.xlane.f32.xlu0 %v1740
      %v1742 = vpop.xlane.xlu0 %1741
      %v1743 = vsel %vm902, %v1712, 0.0
      %1744 = vadd.xlane.f32.xlu0 %v1743
      %v1745 = vpop.xlane.xlu0 %1744
      %v1746 = vsel %vm902, %v1714, 0.0
      %1747 = vadd.xlane.f32.xlu0 %v1746
      %v1748 = vpop.xlane.xlu0 %1747
      %v1749 = vsel %vm902, %v1716, 0.0
      %1750 = vadd.xlane.f32.xlu0 %v1749
      %v1751 = vpop.xlane.xlu0 %1750
      %v1752 = vsel %vm902, %v1718, 0.0
      %1753 = vadd.xlane.f32.xlu0 %v1752
      %v1754 = vpop.xlane.xlu0 %1753
      %v1755 = vrcp.pop %v1721
      %v1756 = vrcp.pop %v1724
      %v1757 = vrcp.pop %v1727
      %v1758 = vrcp.pop %v1730
      %v1759 = vrcp.pop %v1733
      %v1760 = vrcp.pop %v1736
      %v1761 = vrcp.pop %v1739
      %v1762 = vrcp.pop %v1742
      %v1763 = vrcp.pop %v1745
      %v1764 = vrcp.pop %v1748
      %v1765 = vrcp.pop %v1751
      %v1766 = vrcp.pop %v1754
      %v1767 = vmul.f32 %v1696, %v1755
      %v1768 = vmul.f32 %v1698, %v1756
      %v1769 = vmul.f32 %v1700, %v1757
      %v1770 = vmul.f32 %v1702, %v1758
      %v1771 = vmul.f32 %v1704, %v1759
      %v1772 = vmul.f32 %v1706, %v1760
      %v1773 = vmul.f32 %v1708, %v1761
      %v1774 = vmul.f32 %v1710, %v1762
      %v1775 = vmul.f32 %v1712, %v1763
      %v1776 = vmul.f32 %v1714, %v1764
      %v1777 = vmul.f32 %v1716, %v1765
      %v1778 = vmul.f32 %v1718, %v1766
      %v1779 = vpack.c.bf16 %v1768, %v1767
      %v1780 = vpack.c.bf16 %v1770, %v1769
      %v1781 = vpack.c.bf16 %v1772, %v1771
      %v1782 = vpack.c.bf16 %v1774, %v1773
      %v1783 = vpack.c.bf16 %v1776, %v1775
      %v1784 = vpack.c.bf16 %v1778, %v1777
      %1787 = vrot.lane.b32.xlu0 %v1558, 64
      %v1788 = vpop.permute.xlu0 %1787
      %1789 = vrot.lane.b32.xlu0 %v1559, 64
      %v1790 = vpop.permute.xlu0 %1789
      %v1793 = vsel %vm902, %v1779, 0
      %v1796 = vsel %vm902, %v1780, 0
      %v1799 = vsel %vm902, %v1781, 0
      %v1802 = vsel %vm902, %v1782, 0
      %v1805 = vsel %vm902, %v1783, 0
      %v1808 = vsel %vm902, %v1784, 0
      %v1811 = vsel %vm1066, %v1790, 0
      %1813 = vmatpush.bf16.msra.mxu0 0
      %1814 = vmatpush.bf16.msra.mxu0 0
      %1815 = vmatpush.bf16.msra.mxu0 0
      %1816 = vmatpush.bf16.msra.mxu0 0
      %1817 = vmatpush.bf16.msra.mxu0 0
      %1818 = vmatpush.bf16.msra.mxu0 0
      %1819 = vmatpush.bf16.msra.mxu0 %v1811
      %1820 = vmatpush.bf16.msra.mxu0 %v1788
      %1821 = vmatmul.bf16.gmra.mxu0 %v1793
      %v1822 = vpop.f32.mrf.mxu0
      %v1823 = vadd.f32 0.0, %v1822
      %v1824 = vpop.f32.mrf.mxu0
      %v1825 = vadd.f32 0.0, %v1824
      %1826 = vmatmul.bf16.gmra.mxu0 %v1796
      %v1827 = vpop.f32.mrf.mxu0
      %v1828 = vadd.f32 0.0, %v1827
      %v1829 = vpop.f32.mrf.mxu0
      %v1830 = vadd.f32 0.0, %v1829
      %1831 = vmatmul.bf16.gmra.mxu0 %v1799
      %v1832 = vpop.f32.mrf.mxu0
      %v1833 = vadd.f32 0.0, %v1832
      %v1834 = vpop.f32.mrf.mxu0
      %v1835 = vadd.f32 0.0, %v1834
      %1836 = vmatmul.bf16.gmra.mxu0 %v1802
      %v1837 = vpop.f32.mrf.mxu0
      %v1838 = vadd.f32 0.0, %v1837
      %v1839 = vpop.f32.mrf.mxu0
      %v1840 = vadd.f32 0.0, %v1839
      %1841 = vmatmul.bf16.gmra.mxu0 %v1805
      %v1842 = vpop.f32.mrf.mxu0
      %v1843 = vadd.f32 0.0, %v1842
      %v1844 = vpop.f32.mrf.mxu0
      %v1845 = vadd.f32 0.0, %v1844
      %1846 = vmatmul.bf16.gmra.mxu0 %v1808
      %v1847 = vpop.f32.mrf.mxu0
      %v1848 = vadd.f32 0.0, %v1847
      %v1849 = vpop.f32.mrf.mxu0
      %v1850 = vadd.f32 0.0, %v1849
      %1851 = vdwg.mxu0
      %v1852 = vmul.f32 %v1823, %v804
      %v1853 = vmul.f32 %v1825, %v804
      %v1854 = vmul.f32 %v1828, %v804
      %v1855 = vmul.f32 %v1830, %v805
      %v1856 = vmul.f32 %v1833, %v805
      %v1857 = vmul.f32 %v1835, %v805
      %v1858 = vmul.f32 %v1838, %v806
      %v1859 = vmul.f32 %v1840, %v806
      %v1860 = vmul.f32 %v1843, %v806
      %v1861 = vmul.f32 %v1845, %v807
      %v1862 = vmul.f32 %v1848, %v807
      %v1863 = vmul.f32 %v1850, %v807
      %v1864 = vsel %vm590, %v1852, 0.0
      %v1865 = vsel %vm590, %v1855, 0.0
      %v1866 = vadd.f32 %v1864, %v1865
      %v1867 = vsel %vm590, %v1858, 0.0
      %v1868 = vadd.f32 %v1866, %v1867
      %v1869 = vsel %vm590, %v1861, 0.0
      %v1870 = vadd.f32 %v1868, %v1869
      %v1871 = vsel %vm590, %v1853, 0.0
      %v1872 = vsel %vm590, %v1856, 0.0
      %v1873 = vadd.f32 %v1871, %v1872
      %v1874 = vsel %vm590, %v1859, 0.0
      %v1875 = vadd.f32 %v1873, %v1874
      %v1876 = vsel %vm590, %v1862, 0.0
      %v1877 = vadd.f32 %v1875, %v1876
      %v1878 = vsel %vm590, %v1854, 0.0
      %v1879 = vsel %vm590, %v1857, 0.0
      %v1880 = vadd.f32 %v1878, %v1879
      %v1881 = vsel %vm590, %v1860, 0.0
      %v1882 = vadd.f32 %v1880, %v1881
      %v1883 = vsel %vm590, %v1863, 0.0
      %v1884 = vadd.f32 %v1882, %v1883
      %v1885 = vpack.c.bf16 %v1877, %v1870
      %v1886 = vpack.c.bf16 %v1884, %v1884
      %s1887 = scalar_lea.vmem %s9, 16
      %v1888 = vld [vmem:[%s1887] sm:$0xf]
      %v1889 = vld [vmem:[%s1887 + $0x4] sm:$0xf]
      %v1890 = vld [vmem:[%s1887 + $0x8] sm:$0xf]
      %v1891 = vld [vmem:[%s1887 + $0xc] sm:$0xf]
      %s1892 = scalar_lea.vmem %s10, 1
      %v1893 = vld [vmem:[%s1892] sm:$0x1]
      %v1895 = vperm.slane %v1893, 0
      %v1901 = vunpack.c.l.b16 %v1888
      %v1902 = vunpack.c.l.b16 %v1889
      %v1903 = vunpack.c.l.b16 %v1890
      %v1904 = vunpack.c.l.b16 %v1891
      %v1905 = vpack.c.b16 %v1902, %v1901
      %v1906 = vpack.c.b16 %v1904, %v1903
      %v1910 = vsel %vm590, %v1885, 0
      %v1913 = vsel %vm590, %v1886, 0
      %1915 = vmatpush.bf16.msra.mxu0 0
      %1916 = vmatpush.bf16.msra.mxu0 0
      %1917 = vmatpush.bf16.msra.mxu0 0
      %1918 = vmatpush.bf16.msra.mxu0 0
      %1919 = vmatpush.bf16.msra.mxu0 0
      %1920 = vmatpush.bf16.msra.mxu0 0
      %1921 = vmatpush.bf16.msra.mxu0 %v1906
      %1922 = vmatpush.bf16.msra.mxu0 %v1905
      %1923 = vmatmul.bf16.gmra.mxu0 %v1910
      %v1924 = vpop.f32.mrf.mxu0
      %v1925 = vadd.f32 %v1895, %v1924
      %v1926 = vpop.f32.mrf.mxu0
      %v1927 = vadd.f32 %v1895, %v1926
      %1928 = vmatmul.bf16.gmra.mxu0 %v1913
      %v1929 = vpop.f32.mrf.mxu0
      %v1930 = vadd.f32 %v1895, %v1929
      %v1931 = vpop.f32.mrf.mxu0
      %1932 = vdwg.mxu0
      %v1933 = vadd.f32 %v1426, %v1925
      %v1934 = vadd.f32 %v1427, %v1927
      %v1935 = vadd.f32 %v1428, %v1930
      %v1936 = vsel %vm590, %v1933, 0.0
      %1937 = vadd.xlane.f32.xlu0 %v1936
      %v1938 = vpop.xlane.xlu0 %1937
      %v1939 = vsel %vm590, %v1934, 0.0
      %1940 = vadd.xlane.f32.xlu0 %v1939
      %v1941 = vpop.xlane.xlu0 %1940
      %v1942 = vsel %vm590, %v1935, 0.0
      %1943 = vadd.xlane.f32.xlu0 %v1942
      %v1944 = vpop.xlane.xlu0 %1943
      %v1945 = vmul.f32 %v1938, %v606
      %v1946 = vmul.f32 %v1941, %v606
      %v1947 = vmul.f32 %v1944, %v606
      %v1948 = vsub.f32 %v1933, %v1945
      %v1949 = vsub.f32 %v1934, %v1946
      %v1950 = vsub.f32 %v1935, %v1947
      %v1951 = vmul.f32 %v1948, %v1948
      %v1952 = vmul.f32 %v1949, %v1949
      %v1953 = vmul.f32 %v1950, %v1950
      %v1954 = vsel %vm590, %v1951, 0.0
      %1955 = vadd.xlane.f32.xlu0 %v1954
      %v1956 = vpop.xlane.xlu0 %1955
      %v1957 = vsel %vm590, %v1952, 0.0
      %1958 = vadd.xlane.f32.xlu0 %v1957
      %v1959 = vpop.xlane.xlu0 %1958
      %v1960 = vsel %vm590, %v1953, 0.0
      %1961 = vadd.xlane.f32.xlu0 %v1960
      %v1962 = vpop.xlane.xlu0 %1961
      %v1963 = vmul.f32 %v1956, %v606
      %v1964 = vmul.f32 %v1959, %v606
      %v1965 = vmul.f32 %v1962, %v606
      %v1966 = vadd.f32 %v1963, 1e-05
      %v1967 = vadd.f32 %v1964, 1e-05
      %v1968 = vadd.f32 %v1965, 1e-05
      %v1969 = vrsqrt.pop %v1966
      %v1970 = vmul.f32 %v1969, %v1966
      %v1971 = vmul.f32 %v1970, %v1969
      %v1972 = vmul.f32 0.5, %v1971
      %v1973 = vsub.f32 1.5, %v1972
      %v1974 = vmul.f32 %v1969, %v1973
      %vm1975 = vweird.f32 %v1966
      %vm1976 = vweird.f32 %v1969
      %vm1977 = vmor %vm1975, %vm1976
      %v1978 = vsel %vm1977, %v1969, %v1974
      %v1979 = vrsqrt.pop %v1967
      %v1980 = vmul.f32 %v1979, %v1967
      %v1981 = vmul.f32 %v1980, %v1979
      %v1982 = vmul.f32 0.5, %v1981
      %v1983 = vsub.f32 1.5, %v1982
      %v1984 = vmul.f32 %v1979, %v1983
      %vm1985 = vweird.f32 %v1967
      %vm1986 = vweird.f32 %v1979
      %vm1987 = vmor %vm1985, %vm1986
      %v1988 = vsel %vm1987, %v1979, %v1984
      %v1989 = vrsqrt.pop %v1968
      %v1990 = vmul.f32 %v1989, %v1968
      %v1991 = vmul.f32 %v1990, %v1989
      %v1992 = vmul.f32 0.5, %v1991
      %v1993 = vsub.f32 1.5, %v1992
      %v1994 = vmul.f32 %v1989, %v1993
      %vm1995 = vweird.f32 %v1968
      %vm1996 = vweird.f32 %v1989
      %vm1997 = vmor %vm1995, %vm1996
      %v1998 = vsel %vm1997, %v1989, %v1994
      %v1999 = vmul.f32 %v1948, %v1978
      %v2000 = vmul.f32 %v1949, %v1988
      %v2001 = vmul.f32 %v1950, %v1998
      %v2002 = vperm.slane %v1430, 2
      %v2003 = vmul.f32 %v1999, %v2002
      %v2004 = vmul.f32 %v2000, %v2002
      %v2005 = vmul.f32 %v2001, %v2002
      %v2006 = vperm.slane %v1430, 3
      %v2007 = vadd.f32 %v2003, %v2006
      %v2008 = vadd.f32 %v2004, %v2006
      %v2009 = vadd.f32 %v2005, %v2006
      %v2010 = vpack.c.bf16 %v2008, %v2007
      %v2011 = vpack.c.bf16 %v2009, %v2009
      %s2012 = scalar_lea.vmem %s11, 16
      %v2013 = vld [vmem:[%s2012] sm:$0xf]
      %v2014 = vld [vmem:[%s2012 + $0x4] sm:$0xf]
      %v2015 = vld [vmem:[%s2012 + $0x8] sm:$0xf]
      %v2016 = vld [vmem:[%s2012 + $0xc] sm:$0xf]
      %s2017 = scalar_lea.vmem %s12, 1
      %v2018 = vld [vmem:[%s2017] sm:$0x1]
      %v2020 = vperm.slane %v2018, 0
      %v2026 = vunpack.c.l.b16 %v2013
      %v2027 = vunpack.c.l.b16 %v2014
      %v2028 = vunpack.c.l.b16 %v2015
      %v2029 = vunpack.c.l.b16 %v2016
      %v2030 = vpack.c.b16 %v2027, %v2026
      %v2031 = vpack.c.b16 %v2029, %v2028
      %v2035 = vsel %vm590, %v2010, 0
      %v2038 = vsel %vm590, %v2011, 0
      %2040 = vmatpush.bf16.msra.mxu0 0
      %2041 = vmatpush.bf16.msra.mxu0 0
      %2042 = vmatpush.bf16.msra.mxu0 0
      %2043 = vmatpush.bf16.msra.mxu0 0
      %2044 = vmatpush.bf16.msra.mxu0 0
      %2045 = vmatpush.bf16.msra.mxu0 0
      %2046 = vmatpush.bf16.msra.mxu0 %v2031
      %2047 = vmatpush.bf16.msra.mxu0 %v2030
      %2048 = vmatmul.bf16.gmra.mxu0 %v2035
      %v2049 = vpop.f32.mrf.mxu0
      %v2050 = vadd.f32 %v2020, %v2049
      %v2051 = vpop.f32.mrf.mxu0
      %v2052 = vadd.f32 %v2020, %v2051
      %2053 = vmatmul.bf16.gmra.mxu0 %v2038
      %v2054 = vpop.f32.mrf.mxu0
      %v2055 = vadd.f32 %v2020, %v2054
      %v2056 = vpop.f32.mrf.mxu0
      %2057 = vdwg.mxu0
      %v2058 = vmul.f32 %v2050, 0.5
      %v2059 = vmul.f32 %v2052, 0.5
      %v2060 = vmul.f32 %v2055, 0.5
      %v2061 = vmul.f32 %v2050, 0.044715
      %v2062 = vmul.f32 %v2052, 0.044715
      %v2063 = vmul.f32 %v2055, 0.044715
      %v2064 = vmul.f32 %v2061, %v2050
      %v2065 = vmul.f32 %v2062, %v2052
      %v2066 = vmul.f32 %v2063, %v2055
      %v2067 = vmul.f32 %v2064, %v2050
      %v2068 = vmul.f32 %v2065, %v2052
      %v2069 = vmul.f32 %v2066, %v2055
      %v2070 = vadd.f32 %v2050, %v2067
      %v2071 = vadd.f32 %v2052, %v2068
      %v2072 = vadd.f32 %v2055, %v2069
      %v2073 = vmul.f32 %v2070, 0.7978846
      %v2074 = vmul.f32 %v2071, 0.7978846
      %v2075 = vmul.f32 %v2072, 0.7978846
      %v2076 = vtanh.pop %v2073
      %v2077 = vtanh.pop %v2074
      %v2078 = vtanh.pop %v2075
      %v2079 = vadd.f32 %v2076, 1.0
      %v2080 = vadd.f32 %v2077, 1.0
      %v2081 = vadd.f32 %v2078, 1.0
      %v2082 = vmul.f32 %v2058, %v2079
      %v2083 = vmul.f32 %v2059, %v2080
      %v2084 = vmul.f32 %v2060, %v2081
      %v2085 = vpack.c.bf16 %v2083, %v2082
      %v2086 = vpack.c.bf16 %v2084, %v2084
      %s2087 = scalar_lea.vmem %s13, 64
      %v2088 = vld [vmem:[%s2087] sm:$0xf]
      %v2089 = vld [vmem:[%s2087 + $0x4] sm:$0xf]
      %v2090 = vld [vmem:[%s2087 + $0x8] sm:$0xf]
      %v2091 = vld [vmem:[%s2087 + $0xc] sm:$0xf]
      %v2092 = vld [vmem:[%s2087 + $0x10] sm:$0xf]
      %v2093 = vld [vmem:[%s2087 + $0x14] sm:$0xf]
      %v2094 = vld [vmem:[%s2087 + $0x18] sm:$0xf]
      %v2095 = vld [vmem:[%s2087 + $0x1c] sm:$0xf]
      %v2096 = vld [vmem:[%s2087 + $0x20] sm:$0xf]
      %v2097 = vld [vmem:[%s2087 + $0x24] sm:$0xf]
      %v2098 = vld [vmem:[%s2087 + $0x28] sm:$0xf]
      %v2099 = vld [vmem:[%s2087 + $0x2c] sm:$0xf]
      %v2100 = vld [vmem:[%s2087 + $0x30] sm:$0xf]
      %v2101 = vld [vmem:[%s2087 + $0x34] sm:$0xf]
      %v2102 = vld [vmem:[%s2087 + $0x38] sm:$0xf]
      %v2103 = vld [vmem:[%s2087 + $0x3c] sm:$0xf]
      %s2104 = scalar_lea.vmem %s14, 1
      %v2105 = vld [vmem:[%s2104] sm:$0x1]
      %v2107 = vperm.slane %v2105, 0
      %v2125 = vunpack.c.l.b16 %v2088
      %v2126 = vunpack.c.l.b16 %v2089
      %v2127 = vunpack.c.l.b16 %v2090
      %v2128 = vunpack.c.l.b16 %v2091
      %v2129 = vunpack.c.l.b16 %v2092
      %v2130 = vunpack.c.l.b16 %v2093
      %v2131 = vunpack.c.l.b16 %v2094
      %v2132 = vunpack.c.l.b16 %v2095
      %v2133 = vunpack.c.l.b16 %v2096
      %v2134 = vunpack.c.l.b16 %v2097
      %v2135 = vunpack.c.l.b16 %v2098
      %v2136 = vunpack.c.l.b16 %v2099
      %v2137 = vunpack.c.l.b16 %v2100
      %v2138 = vunpack.c.l.b16 %v2101
      %v2139 = vunpack.c.l.b16 %v2102
      %v2140 = vunpack.c.l.b16 %v2103
      %v2141 = vpack.c.b16 %v2126, %v2125
      %v2142 = vpack.c.b16 %v2128, %v2127
      %v2143 = vpack.c.b16 %v2130, %v2129
      %v2144 = vpack.c.b16 %v2132, %v2131
      %v2145 = vpack.c.b16 %v2134, %v2133
      %v2146 = vpack.c.b16 %v2136, %v2135
      %v2147 = vpack.c.b16 %v2138, %v2137
      %v2148 = vpack.c.b16 %v2140, %v2139
      %2157 = vmatpush.bf16.msra.mxu0 %v2148
      %2158 = vmatpush.bf16.msra.mxu0 %v2147
      %2159 = vmatpush.bf16.msra.mxu0 %v2146
      %2160 = vmatpush.bf16.msra.mxu0 %v2145
      %2161 = vmatpush.bf16.msra.mxu0 %v2144
      %2162 = vmatpush.bf16.msra.mxu0 %v2143
      %2163 = vmatpush.bf16.msra.mxu0 %v2142
      %2164 = vmatpush.bf16.msra.mxu0 %v2141
      %2165 = vmatmul.bf16.gmra.mxu0 %v2085
      %v2166 = vpop.f32.mrf.mxu0
      %v2167 = vadd.f32 %v2107, %v2166
      %v2168 = vpop.f32.mrf.mxu0
      %2169 = vmatmul.bf16.gmra.mxu0 %v2086
      %v2170 = vpop.f32.mrf.mxu0
      %v2171 = vpop.f32.mrf.mxu0
      %2172 = vdwg.mxu0
      %v2173 = vadd.f32 %v1933, %v2167
      %vm2174 = vcmask 253952
      %v2175 = vsel %vm2174, %v2173, 0.0
      %2176 = vadd.xlane.f32.xlu0 %v2175
      %v2177 = vpop.xlane.xlu0 %2176
      %v2178 = vmul.f32 %v2177, %v606
      %v2179 = vsub.f32 %v2173, %v2178
      %v2180 = vmul.f32 %v2179, %v2179
      %v2181 = vsel %vm2174, %v2180, 0.0
      %2182 = vadd.xlane.f32.xlu0 %v2181
      %v2183 = vpop.xlane.xlu0 %2182
      %v2184 = vmul.f32 %v2183, %v606
      %v2185 = vadd.f32 %v2184, 1e-05
      %v2186 = vrsqrt.pop %v2185
      %v2187 = vmul.f32 %v2186, %v2185
      %v2188 = vmul.f32 %v2187, %v2186
      %v2189 = vmul.f32 0.5, %v2188
      %v2190 = vsub.f32 1.5, %v2189
      %v2191 = vmul.f32 %v2186, %v2190
      %vm2192 = vweird.f32 %v2185
      %vm2193 = vweird.f32 %v2186
      %vm2194 = vmor %vm2192, %vm2193
      %v2195 = vsel %vm2194, %v2186, %v2191
      %v2196 = vmul.f32 %v2179, %v2195
      %v2198 = vrot.slane %v521, 2
      %v2200 = vmul.f32 %v2196, %v2198
      %v2201 = vrot.slane %v521, 3
      %v2203 = vadd.f32 %v2200, %v2201
      %v2204 = vpack.c.bf16 %v2203, %v2203
      %v2205 = vld [vmem:[%s15] sm:$0xf]
      %v2206 = vld [vmem:[%s15 + $0x4] sm:$0xf]
      %v2207 = vld [vmem:[%s15 + $0x8] sm:$0xf]
      %v2208 = vld [vmem:[%s15 + $0xc] sm:$0xf]
      %v2213 = vunpack.c.l.b16 %v2205
      %v2214 = vunpack.c.l.b16 %v2206
      %v2215 = vunpack.c.l.b16 %v2207
      %v2216 = vunpack.c.l.b16 %v2208
      %v2217 = vpack.c.b16 %v2214, %v2213
      %v2218 = vpack.c.b16 %v2216, %v2215
      %v2222 = vsel %vm590, %v2204, 0
      %2224 = vmatpush.bf16.msra.mxu0 0
      %2225 = vmatpush.bf16.msra.mxu0 0
      %2226 = vmatpush.bf16.msra.mxu0 0
      %2227 = vmatpush.bf16.msra.mxu0 0
      %2228 = vmatpush.bf16.msra.mxu0 0
      %2229 = vmatpush.bf16.msra.mxu0 0
      %2230 = vmatpush.bf16.msra.mxu0 %v2218
      %2231 = vmatpush.bf16.msra.mxu0 %v2217
      %2232 = vmatmul.bf16.gmra.mxu0 %v2222
      %v2233 = vpop.f32.mrf.mxu0
      %v2234 = vadd.f32 0.0, %v2233
      %v2235 = vpop.f32.mrf.mxu0
      %2236 = vdwg.mxu0
      %v2237 = vperm.slane %v2234, 0
      %2238 = vst [vmem:[%s519] sm:$0xff] %v2237
      %p2239 = scmp.lt.s32.totalorder %s27, 1
      %s2240 = scalar_select %p2239, %s27, 1
      %s2241 = smul.addr %s2240, 8
      %s2242 = scalar_lea.vmem %s16, %s2241
      // Predicated region
      $region85: #{clip_encode_image.1} parent=83 // pred_check
        %p2243 = pneg %p386
      $region86: #{clip_encode_image.1} parent=83 // pred_check_branch
        %2245 = sbr.rel (%p2243) target = $region88
      $region87: #{clip_encode_image.1} parent=83 // pred_region
        _
      $region88: #{clip_encode_image.1} parent=83 // pred_fallthru
        _
    $region84: #{clip_encode_image.1} parent=5 // pred_fallthru
      _
    %p2246 = scmp.le.s32.totalorder 2, %s22
    // Predicated region
    $region89: #{clip_encode_image.1} parent=5 // pred_check
      %p2247 = pneg %p2246
    $region90: #{clip_encode_image.1} parent=5 // pred_check_branch
      %2249 = sbr.rel (%p2247) target = $region92
    $region91: #{clip_encode_image.1} parent=5 // pred_region
      %s2250 = ssub.s32 %s22, 2
      // Predicated region
      $region93: #{clip_encode_image.1} parent=91 // pred_check
        %p2251 = pneg %p392
      $region94: #{clip_encode_image.1} parent=91 // pred_check_branch
        %2253 = sbr.rel (%p2251) target = $region96
      $region95: #{clip_encode_image.1} parent=91 // pred_region
        %p2254 = scmp.lt.s32.totalorder %s28, 1
        %s2255 = scalar_select %p2254, %s28, 1
        %s2256 = smul.addr %s2255, 8
        %s2257 = scalar_lea.vmem %s16, %s2256
      $region96: #{clip_encode_image.1} parent=91 // pred_fallthru
        _
    $region92: #{clip_encode_image.1} parent=5 // pred_fallthru
      _
  $region6: #{clip_encode_image.1} parent=0 // loop_footer
    %s26 = sadd.s32 1, %s22
  $region7: #{clip_encode_image.1} parent=0 // loop_footer_branch
    %21 = sbr.rel target = $region3
  $region8: #{clip_encode_image.1} parent=0 // loop_exit
    _

</llo_original>
